<compile_context>
chip_gen: v5e
topology: v5e:2x2
jax: 0.10.0
libtpu: 0.0.40
codegen_flags: <defaults>
</compile_context>

<pallas_src>
import functools

import jax
import jax.numpy as jnp
import numpy as np
from jax.experimental import pallas as pl
from jax.experimental.pallas import tpu as pltpu

ALPHA = 0.2
_BIG = 1e20            # "no opposite-class candidate" squared-distance sentinel
_COORD_PAD = 1e10      # padded-pixel coordinate: d2 >= _BIG, never wins a min
_LOGIT_PAD = -1e4      # padded-pixel logit: sigmoid == 0 exactly -> err == 0


def _hausdorff_kernel(pred_row_ref, targ_row_ref, pred_col_ref, targ_col_ref,
                      rq_ref, cq_ref, rc_ref, cc_ref,
                      out_p_ref, out_t_ref, acc_p_ref, acc_t_ref,
                      *, alpha, tj):
    j = pl.program_id(2)
    nj = pl.num_programs(2)

    @pl.when(j == 0)
    def _():
        acc_p_ref[...] = jnp.full(acc_p_ref.shape, _BIG, acc_p_ref.dtype)
        acc_t_ref[...] = jnp.full(acc_t_ref.shape, _BIG, acc_t_ref.dtype)

    # Candidate tile (TJ sublanes) sliced out of the VMEM-resident column views
    # (no per-step streaming DMAs for these tiny arrays).
    joff = pl.multiple_of(j * tj, 8)
    rc_t = rc_ref[pl.ds(joff, tj), :]                     # (TJ, 1)
    cc_t = cc_ref[pl.ds(joff, tj), :]
    p_j = pred_col_ref[pl.ds(joff, tj), :] > 0.0          # (TJ, 1) bool
    t_j = targ_col_ref[pl.ds(joff, tj), :] > 0.5

    # Squared distance from every candidate (sublane) to every query (lane).
    dr = rc_t - rq_ref[...]                               # (TJ, TQ)
    dc = cc_t - cq_ref[...]
    d2 = dr * dr + dc * dc

    p_i = pred_row_ref[...] > 0.0                         # (1, TQ) bool
    t_i = targ_row_ref[...] > 0.5

    # "opposite class" mask via boolean XOR (single VPU op per field).
    opp_p = p_j != p_i                                    # (TJ, TQ)
    opp_t = t_j != t_i

    cand_p = jnp.where(opp_p, d2, _BIG)
    cand_t = jnp.where(opp_t, d2, _BIG)

    # Fold TJ sublanes down to 8 with pure vreg-wise VPU mins (no XLU), then
    # merge into the persistent (8, TQ) running-min accumulators.
    tq = cand_p.shape[-1]
    fold_p = jnp.min(cand_p.reshape(tj // 8, 8, tq), axis=0)
    fold_t = jnp.min(cand_t.reshape(tj // 8, 8, tq), axis=0)
    acc_p_ref[...] = jnp.minimum(acc_p_ref[...], fold_p)
    acc_t_ref[...] = jnp.minimum(acc_t_ref[...], fold_t)

    @pl.when(j == nj - 1)
    def _():
        # Single 8-sublane reduce -> lane-dense (1, TQ) squared-distance fields.
        mn_p = jnp.min(acc_p_ref[...], axis=0, keepdims=True)
        mn_t = jnp.min(acc_t_ref[...], axis=0, keepdims=True)
        field_p = jnp.sqrt(mn_p)      # >= 1 for real pixels (or _BIG sentinel)
        field_t = jnp.sqrt(mn_t)

        def powa(x):                  # x ** alpha on strictly positive x (EUP)
            return jnp.exp(alpha * jnp.log(jnp.maximum(x, 1e-30)))

        sig = jax.nn.sigmoid(pred_row_ref[...])
        err = (sig - targ_row_ref[...]) ** 2              # padded queries -> 0
        # Per-field partial sums; per-image "has foreground" gating needs a
        # whole-image reduction and is applied in the wrapper.
        out_p_ref[...] = jnp.sum(err * powa(field_p), keepdims=True)
        out_t_ref[...] = jnp.sum(err * powa(field_t), keepdims=True)


def _round_up(x, m):
    return ((x + m - 1) // m) * m


def _choose_tiles(n):
    """Query (lane) tile TQ, candidate (sublane) tile TJ, padded length Npad."""
    tq = 2048 if n >= 2048 else _round_up(n, 128)   # lane tile: multiple of 128
    npad = _round_up(n, tq)                          # multiple of TQ (and 128)
    # Keep the (TJ, TQ) f32 working tile ~2 MiB so a handful of fused
    # temporaries fits comfortably in every generation's VMEM (incl. v7x).
    budget = 2 * 1024 * 1024
    tj = 8
    for cand in (512, 256, 128, 64, 32, 16, 8):
        if npad % cand == 0 and cand * tq * 4 <= budget:
            tj = cand
            break
    return tq, tj, npad


def _vmem_limit_bytes():
    """Generation-aware VMEM budget (half of physical capacity)."""
    try:
        cap = int(pltpu.get_tpu_info().vmem_capacity_bytes)
    except Exception:
        cap = 64 * 1024 * 1024          # v7x-safe fallback
    return max(32 * 1024 * 1024, min(cap // 2, 96 * 1024 * 1024))


def hausdorff_dt_loss(pred, target, alpha=ALPHA):
    assert pred.ndim == 4 and pred.shape[1] == 1, "expects (B, 1, H, W)"
    assert pred.shape == target.shape
    B, C, H, W = pred.shape
    N = H * W
    TQ, TJ, Npad = _choose_tiles(N)
    NQ, NJ = Npad // TQ, Npad // TJ
    pad = Npad - N

    pred_flat = pred.reshape(B, N).astype(jnp.float32)
    targ_flat = target.reshape(B, N).astype(jnp.float32)
    if pad:
        pred_flat = jnp.pad(pred_flat, ((0, 0), (0, pad)), constant_values=_LOGIT_PAD)
        targ_flat = jnp.pad(targ_flat, ((0, 0), (0, pad)), constant_values=0.0)

    pred_row = pred_flat.reshape(B, 1, Npad)
    targ_row = targ_flat.reshape(B, 1, Npad)
    pred_col = pred_flat.reshape(B, Npad, 1)
    targ_col = targ_flat.reshape(B, Npad, 1)

    # Pixel coordinates, precomputed once (batch-invariant); padded pixels get
    # a huge coordinate so their squared distance can never win a min.
    ridx = jnp.repeat(jnp.arange(H, dtype=jnp.float32), W)
    cidx = jnp.tile(jnp.arange(W, dtype=jnp.float32), H)
    if pad:
        ridx = jnp.pad(ridx, (0, pad), constant_values=_COORD_PAD)
        cidx = jnp.pad(cidx, (0, pad), constant_values=_COORD_PAD)
    rq, cq = ridx.reshape(1, Npad), cidx.reshape(1, Npad)
    rc, cc = ridx.reshape(Npad, 1), cidx.reshape(Npad, 1)

    kernel = functools.partial(_hausdorff_kernel, alpha=alpha, tj=TJ)
    out_p, out_t = pl.pallas_call(
        kernel,
        out_shape=(jax.ShapeDtypeStruct((B, NQ, 1, 1), jnp.float32),
                   jax.ShapeDtypeStruct((B, NQ, 1, 1), jnp.float32)),
        grid_spec=pltpu.PrefetchScalarGridSpec(
            num_scalar_prefetch=0,
            grid=(B, NQ, NJ),
            in_specs=[
                pl.BlockSpec((None, 1, TQ), lambda b, q, j: (b, 0, q)),    # pred row tile
                pl.BlockSpec((None, 1, TQ), lambda b, q, j: (b, 0, q)),    # targ row tile
                pl.BlockSpec((None, Npad, 1), lambda b, q, j: (b, 0, 0)),  # pred col (resident)
                pl.BlockSpec((None, Npad, 1), lambda b, q, j: (b, 0, 0)),  # targ col (resident)
                pl.BlockSpec((1, TQ), lambda b, q, j: (0, q)),             # row coords, query tile
                pl.BlockSpec((1, TQ), lambda b, q, j: (0, q)),             # col coords, query tile
                pl.BlockSpec((Npad, 1), lambda b, q, j: (0, 0)),           # row coords (resident)
                pl.BlockSpec((Npad, 1), lambda b, q, j: (0, 0)),           # col coords (resident)
            ],
            out_specs=(
                pl.BlockSpec((None, None, 1, 1), lambda b, q, j: (b, q, 0, 0)),
                pl.BlockSpec((None, None, 1, 1), lambda b, q, j: (b, q, 0, 0)),
            ),
            scratch_shapes=[pltpu.VMEM((8, TQ), jnp.float32),
                            pltpu.VMEM((8, TQ), jnp.float32)],
        ),
        compiler_params=pltpu.CompilerParams(
            dimension_semantics=("parallel", "parallel", "arbitrary"),
            vmem_limit_bytes=_vmem_limit_bytes(),
        ),
    )(pred_row, targ_row, pred_col, targ_col, rq, cq, rc, cc)

    # Per-image "any foreground" gates (whole-image reductions -> wrapper),
    # matching the torch module's `if fg_mask.any()` zero-field behavior.
    gate_p = jnp.any(pred.astype(jnp.float32).reshape(B, -1) > 0.0, axis=1)
    gate_t = jnp.any(target.astype(jnp.float32).reshape(B, -1) > 0.5, axis=1)
    sum_p = jnp.sum(out_p.reshape(B, NQ), axis=1)
    sum_t = jnp.sum(out_t.reshape(B, NQ), axis=1)
    total = jnp.sum(sum_p * gate_p.astype(jnp.float32)
                    + sum_t * gate_t.astype(jnp.float32))
    return total / (B * C * H * W)


def _reference(pred, target, alpha=ALPHA):
    """Pure numpy reference with the same brute-force exact EDT."""
    pred = np.asarray(pred, np.float32)
    target = np.asarray(target, np.float32)
    B, C, H, W = pred.shape
    sig = 1.0 / (1.0 + np.exp(-pred))
    ys, xs = np.meshgrid(np.arange(H), np.arange(W), indexing="ij")
    coords = np.stack([ys.ravel(), xs.ravel()], -1).astype(np.float32)
    d2 = ((coords[:, None, :] - coords[None, :, :]) ** 2).sum(-1)

    def edt(mask):
        flat = mask.ravel()
        cand = np.where(flat[None, :], _BIG, d2)
        return np.sqrt(cand.min(1)).reshape(mask.shape).astype(np.float32)

    def dfield(img):
        out = np.zeros_like(img)
        for b in range(B):
            fg = img[b, 0] > 0.5
            if fg.any():
                out[b, 0] = edt(fg) + edt(~fg)
        return out

    pdt, tdt = dfield(sig), dfield(target)
    err = (sig - target) ** 2
    dist = pdt ** alpha + tdt ** alpha
    return float((err * dist).mean())


if __name__ == "__main__":
    key = jax.random.PRNGKey(0)
    k1, k2 = jax.random.split(key)
    B, C, H, W = 2, 1, 16, 16
    pred = jax.random.normal(k1, (B, C, H, W), dtype=jnp.float32)           # logits
    target = (jax.random.uniform(k2, (B, C, H, W)) > 0.5).astype(jnp.float32)

    loss = jax.jit(hausdorff_dt_loss)(pred, target)
    loss = jax.block_until_ready(loss)

    ref = _reference(np.asarray(pred), np.asarray(target))
    assert abs(float(loss) - ref) < 1e-3 * max(1.0, abs(ref)), (float(loss), ref)
    print("KERNEL_OK")
</pallas_src>

<mosaic_0001>
module attributes {stable_mosaic.version = 11 : i64} {
  func.func @_hausdorff_kernel(%arg0: i32, %arg1: i32, %arg2: i32, %arg3: memref<1x1x256xf32, #tpu.memory_space<vmem>>, %arg4: memref<1x1x256xf32, #tpu.memory_space<vmem>>, %arg5: memref<1x256x1xf32, #tpu.memory_space<vmem>>, %arg6: memref<1x256x1xf32, #tpu.memory_space<vmem>>, %arg7: memref<1x256xf32, #tpu.memory_space<vmem>>, %arg8: memref<1x256xf32, #tpu.memory_space<vmem>>, %arg9: memref<256x1xf32, #tpu.memory_space<vmem>>, %arg10: memref<256x1xf32, #tpu.memory_space<vmem>>, %arg11: memref<1x1x1x1xf32, #tpu.memory_space<vmem>>, %arg12: memref<1x1x1x1xf32, #tpu.memory_space<vmem>>, %arg13: memref<8x256xf32, #tpu.memory_space<vmem>>, %arg14: memref<8x256xf32, #tpu.memory_space<vmem>>) attributes {dimension_semantics = [#tpu.dimension_semantics<parallel>, #tpu.dimension_semantics<parallel>, #tpu.dimension_semantics<arbitrary>], iteration_bounds = array<i64: 2, 1, 1>, scalar_prefetch = 0 : i64, scratch_operands = 2 : i64, tpu.core_type = #tpu.core_type<tc>, window_params = [{transform_indices = @transform_0, window_bounds = array<i64: 1, 1, 256>}, {transform_indices = @transform_1, window_bounds = array<i64: 1, 1, 256>}, {transform_indices = @transform_2, window_bounds = array<i64: 1, 256, 1>}, {transform_indices = @transform_3, window_bounds = array<i64: 1, 256, 1>}, {transform_indices = @transform_4, window_bounds = array<i64: 1, 256>}, {transform_indices = @transform_5, window_bounds = array<i64: 1, 256>}, {pipeline_mode = #tpu.pipeline_mode<synchronous>, transform_indices = @transform_6, window_bounds = array<i64: 256, 1>}, {pipeline_mode = #tpu.pipeline_mode<synchronous>, transform_indices = @transform_7, window_bounds = array<i64: 256, 1>}, {transform_indices = @transform_8, window_bounds = array<i64: 1, 1, 1, 1>}, {transform_indices = @transform_9, window_bounds = array<i64: 1, 1, 1, 1>}]} {
    %c0_i32 = arith.constant 0 : i32
    %0 = arith.cmpi eq, %arg2, %c0_i32 : i32
    %1 = arith.extui %0 : i1 to i32
    %c0_i32_0 = arith.constant 0 : i32
    %2 = arith.cmpi ne, %1, %c0_i32_0 : i32
    scf.if %2 {
      %cst_33 = arith.constant 1.000000e+20 : f32
      %65 = vector.broadcast %cst_33 : f32 to vector<8x256xf32>
      %c0_34 = arith.constant 0 : index
      %c0_35 = arith.constant 0 : index
      %66 = vector.load %arg13[%c0_34, %c0_35] : memref<8x256xf32, #tpu.memory_space<vmem>>, vector<8x256xf32>
      tpu.vector_store %arg13[%c0_34, %c0_35], %65 {strides = array<i32>} : memref<8x256xf32, #tpu.memory_space<vmem>>, vector<8x256xf32>,
      %cst_36 = arith.constant 1.000000e+20 : f32
      %67 = vector.broadcast %cst_36 : f32 to vector<8x256xf32>
      %c0_37 = arith.constant 0 : index
      %c0_38 = arith.constant 0 : index
      %68 = vector.load %arg14[%c0_37, %c0_38] : memref<8x256xf32, #tpu.memory_space<vmem>>, vector<8x256xf32>
      tpu.vector_store %arg14[%c0_37, %c0_38], %67 {strides = array<i32>} : memref<8x256xf32, #tpu.memory_space<vmem>>, vector<8x256xf32>,
    } else {
    }
    %c256_i32 = arith.constant 256 : i32
    %3 = arith.muli %arg2, %c256_i32 : i32
    %4 = tpu.assume_multiple %3, 8 : i32
    %5 = arith.index_cast %4 : i32 to index
    %c0 = arith.constant 0 : index
    %6 = vector.load %arg9[%5, %c0] : memref<256x1xf32, #tpu.memory_space<vmem>>, vector<256x1xf32>
    %7 = arith.index_cast %4 : i32 to index
    %c0_1 = arith.constant 0 : index
    %8 = vector.load %arg10[%7, %c0_1] : memref<256x1xf32, #tpu.memory_space<vmem>>, vector<256x1xf32>
    %c0_2 = arith.constant 0 : index
    %9 = arith.index_cast %4 : i32 to index
    %c0_3 = arith.constant 0 : index
    %10 = vector.load %arg5[%c0_2, %9, %c0_3] : memref<1x256x1xf32, #tpu.memory_space<vmem>>, vector<1x256x1xf32>
    %11 = vector.shape_cast %10 : vector<1x256x1xf32> to vector<256x1xf32>
    %cst = arith.constant 0.000000e+00 : f32
    %12 = vector.broadcast %cst : f32 to vector<256x1xf32>
    %13 = arith.cmpf ogt, %11, %12 : vector<256x1xf32>
    %c0_4 = arith.constant 0 : index
    %14 = arith.index_cast %4 : i32 to index
    %c0_5 = arith.constant 0 : index
    %15 = vector.load %arg6[%c0_4, %14, %c0_5] : memref<1x256x1xf32, #tpu.memory_space<vmem>>, vector<1x256x1xf32>
    %16 = vector.shape_cast %15 : vector<1x256x1xf32> to vector<256x1xf32>
    %cst_6 = arith.constant 5.000000e-01 : f32
    %17 = vector.broadcast %cst_6 : f32 to vector<256x1xf32>
    %18 = arith.cmpf ogt, %16, %17 : vector<256x1xf32>
    %c0_7 = arith.constant 0 : index
    %c0_8 = arith.constant 0 : index
    %19 = vector.load %arg7[%c0_7, %c0_8] : memref<1x256xf32, #tpu.memory_space<vmem>>, vector<1x256xf32>
    %20 = vector.broadcast %6 : vector<256x1xf32> to vector<256x256xf32>
    %21 = vector.broadcast %19 : vector<1x256xf32> to vector<256x256xf32>
    %22 = arith.subf %20, %21 : vector<256x256xf32>
    %c0_9 = arith.constant 0 : index
    %c0_10 = arith.constant 0 : index
    %23 = vector.load %arg8[%c0_9, %c0_10] : memref<1x256xf32, #tpu.memory_space<vmem>>, vector<1x256xf32>
    %24 = vector.broadcast %8 : vector<256x1xf32> to vector<256x256xf32>
    %25 = vector.broadcast %23 : vector<1x256xf32> to vector<256x256xf32>
    %26 = arith.subf %24, %25 : vector<256x256xf32>
    %27 = arith.mulf %22, %22 : vector<256x256xf32>
    %28 = arith.mulf %26, %26 : vector<256x256xf32>
    %29 = arith.addf %27, %28 : vector<256x256xf32>
    %c0_11 = arith.constant 0 : index
    %c0_12 = arith.constant 0 : index
    %c0_13 = arith.constant 0 : index
    %30 = vector.load %arg3[%c0_11, %c0_12, %c0_13] : memref<1x1x256xf32, #tpu.memory_space<vmem>>, vector<1x1x256xf32>
    %31 = vector.shape_cast %30 : vector<1x1x256xf32> to vector<1x256xf32>
    %cst_14 = arith.constant 0.000000e+00 : f32
    %32 = vector.broadcast %cst_14 : f32 to vector<1x256xf32>
    %33 = arith.cmpf ogt, %31, %32 : vector<1x256xf32>
    %c0_15 = arith.constant 0 : index
    %c0_16 = arith.constant 0 : index
    %c0_17 = arith.constant 0 : index
    %34 = vector.load %arg4[%c0_15, %c0_16, %c0_17] : memref<1x1x256xf32, #tpu.memory_space<vmem>>, vector<1x1x256xf32>
    %35 = vector.shape_cast %34 : vector<1x1x256xf32> to vector<1x256xf32>
    %cst_18 = arith.constant 5.000000e-01 : f32
    %36 = vector.broadcast %cst_18 : f32 to vector<1x256xf32>
    %37 = arith.cmpf ogt, %35, %36 : vector<1x256xf32>
    %38 = vector.broadcast %13 : vector<256x1xi1> to vector<256x256xi1>
    %39 = vector.broadcast %33 : vector<1x256xi1> to vector<256x256xi1>
    %40 = vector.broadcast %38 : vector<256x256xi1> to vector<256x256xi1>
    %41 = vector.broadcast %39 : vector<256x256xi1> to vector<256x256xi1>
    %42 = arith.xori %40, %41 : vector<256x256xi1>
    %43 = vector.broadcast %18 : vector<256x1xi1> to vector<256x256xi1>
    %44 = vector.broadcast %37 : vector<1x256xi1> to vector<256x256xi1>
    %45 = vector.broadcast %43 : vector<256x256xi1> to vector<256x256xi1>
    %46 = vector.broadcast %44 : vector<256x256xi1> to vector<256x256xi1>
    %47 = arith.xori %45, %46 : vector<256x256xi1>
    %cst_19 = arith.constant 1.000000e+20 : f32
    %48 = vector.broadcast %cst_19 : f32 to vector<256x256xf32>
    %49 = arith.select %42, %29, %48 : vector<256x256xi1>, vector<256x256xf32>
    %cst_20 = arith.constant 1.000000e+20 : f32
    %50 = vector.broadcast %cst_20 : f32 to vector<256x256xf32>
    %51 = arith.select %47, %29, %50 : vector<256x256xi1>, vector<256x256xf32>
    %52 = vector.shape_cast %49 : vector<256x256xf32> to vector<32x8x256xf32>
    %cst_21 = arith.constant dense<0x7F800000> : vector<8x256xf32>
    %53 = vector.multi_reduction <minimumf>, %52, %cst_21 [0] : vector<32x8x256xf32> to vector<8x256xf32>
    %54 = vector.shape_cast %51 : vector<256x256xf32> to vector<32x8x256xf32>
    %cst_22 = arith.constant dense<0x7F800000> : vector<8x256xf32>
    %55 = vector.multi_reduction <minimumf>, %54, %cst_22 [0] : vector<32x8x256xf32> to vector<8x256xf32>
    %c0_23 = arith.constant 0 : index
    %c0_24 = arith.constant 0 : index
    %56 = vector.load %arg13[%c0_23, %c0_24] : memref<8x256xf32, #tpu.memory_space<vmem>>, vector<8x256xf32>
    %57 = arith.minimumf %56, %53 : vector<8x256xf32>
    %c0_25 = arith.constant 0 : index
    %c0_26 = arith.constant 0 : index
    %58 = vector.load %arg13[%c0_25, %c0_26] : memref<8x256xf32, #tpu.memory_space<vmem>>, vector<8x256xf32>
    tpu.vector_store %arg13[%c0_25, %c0_26], %57 {strides = array<i32>} : memref<8x256xf32, #tpu.memory_space<vmem>>, vector<8x256xf32>,
    %c0_27 = arith.constant 0 : index
    %c0_28 = arith.constant 0 : index
    %59 = vector.load %arg14[%c0_27, %c0_28] : memref<8x256xf32, #tpu.memory_space<vmem>>, vector<8x256xf32>
    %60 = arith.minimumf %59, %55 : vector<8x256xf32>
    %c0_29 = arith.constant 0 : index
    %c0_30 = arith.constant 0 : index
    %61 = vector.load %arg14[%c0_29, %c0_30] : memref<8x256xf32, #tpu.memory_space<vmem>>, vector<8x256xf32>
    tpu.vector_store %arg14[%c0_29, %c0_30], %60 {strides = array<i32>} : memref<8x256xf32, #tpu.memory_space<vmem>>, vector<8x256xf32>,
    %c0_i32_31 = arith.constant 0 : i32
    %62 = arith.cmpi eq, %arg2, %c0_i32_31 : i32
    %63 = arith.extui %62 : i1 to i32
    %c0_i32_32 = arith.constant 0 : i32
    %64 = arith.cmpi ne, %63, %c0_i32_32 : i32
    scf.if %64 {
      %c0_33 = arith.constant 0 : index
      %c0_34 = arith.constant 0 : index
      %65 = vector.load %arg13[%c0_33, %c0_34] : memref<8x256xf32, #tpu.memory_space<vmem>>, vector<8x256xf32>
      %cst_35 = arith.constant dense<0x7F800000> : vector<256xf32>
      %66 = vector.multi_reduction <minimumf>, %65, %cst_35 [0] : vector<8x256xf32> to vector<256xf32>
      %67 = vector.shape_cast %66 : vector<256xf32> to vector<1x256xf32>
      %c0_36 = arith.constant 0 : index
      %c0_37 = arith.constant 0 : index
      %68 = vector.load %arg14[%c0_36, %c0_37] : memref<8x256xf32, #tpu.memory_space<vmem>>, vector<8x256xf32>
      %cst_38 = arith.constant dense<0x7F800000> : vector<256xf32>
      %69 = vector.multi_reduction <minimumf>, %68, %cst_38 [0] : vector<8x256xf32> to vector<256xf32>
      %70 = vector.shape_cast %69 : vector<256xf32> to vector<1x256xf32>
      %71 = math.sqrt %67 : vector<1x256xf32>
      %72 = math.sqrt %70 : vector<1x256xf32>
      %c0_39 = arith.constant 0 : index
      %c0_40 = arith.constant 0 : index
      %c0_41 = arith.constant 0 : index
      %73 = vector.load %arg3[%c0_39, %c0_40, %c0_41] : memref<1x1x256xf32, #tpu.memory_space<vmem>>, vector<1x1x256xf32>
      %74 = vector.shape_cast %73 : vector<1x1x256xf32> to vector<1x256xf32>
      %75 = arith.negf %74 : vector<1x256xf32>
      %76 = math.exp %75 : vector<1x256xf32>
      %cst_42 = arith.constant 1.000000e+00 : f32
      %77 = vector.broadcast %cst_42 : f32 to vector<1x256xf32>
      %78 = arith.addf %77, %76 : vector<1x256xf32>
      %79 = arith.divf %77, %78 : vector<1x256xf32>
      %c0_43 = arith.constant 0 : index
      %c0_44 = arith.constant 0 : index
      %c0_45 = arith.constant 0 : index
      %80 = vector.load %arg4[%c0_43, %c0_44, %c0_45] : memref<1x1x256xf32, #tpu.memory_space<vmem>>, vector<1x1x256xf32>
      %81 = vector.shape_cast %80 : vector<1x1x256xf32> to vector<1x256xf32>
      %82 = arith.subf %79, %81 : vector<1x256xf32>
      %83 = arith.mulf %82, %82 : vector<1x256xf32>
      %cst_46 = arith.constant 1.000000e-30 : f32
      %84 = vector.broadcast %cst_46 : f32 to vector<1x256xf32>
      %85 = arith.maximumf %71, %84 : vector<1x256xf32>
      %86 = math.log %85 : vector<1x256xf32>
      %cst_47 = arith.constant 2.000000e-01 : f32
      %87 = vector.broadcast %cst_47 : f32 to vector<1x256xf32>
      %88 = arith.mulf %87, %86 : vector<1x256xf32>
      %89 = math.exp %88 : vector<1x256xf32>
      %90 = arith.mulf %83, %89 : vector<1x256xf32>
      %91 = vector.shape_cast %90 : vector<1x256xf32> to vector<1x1x256xf32>
      %cst_48 = arith.constant dense<0.000000e+00> : vector<1xf32>
      %92 = vector.multi_reduction <add>, %91, %cst_48 [1, 2] : vector<1x1x256xf32> to vector<1xf32>
      %93 = vector.shape_cast %92 : vector<1xf32> to vector<1x1x1xf32>
      %94 = vector.extract %93[0, 0, 0] : f32 from vector<1x1x1xf32>
      %95 = vector.broadcast %94 : f32 to vector<1x1xf32>
      %c0_49 = arith.constant 0 : index
      %c0_50 = arith.constant 0 : index
      %c0_51 = arith.constant 0 : index
      %c0_52 = arith.constant 0 : index
      %96 = vector.load %arg11[%c0_49, %c0_50, %c0_51, %c0_52] : memref<1x1x1x1xf32, #tpu.memory_space<vmem>>, vector<1x1x1x1xf32>
      %97 = vector.shape_cast %96 : vector<1x1x1x1xf32> to vector<1x1xf32>
      %98 = vector.shape_cast %95 : vector<1x1xf32> to vector<1x1x1x1xf32>
      tpu.vector_store %arg11[%c0_49, %c0_50, %c0_51, %c0_52], %98 {strides = array<i32>} : memref<1x1x1x1xf32, #tpu.memory_space<vmem>>, vector<1x1x1x1xf32>,
      %cst_53 = arith.constant 1.000000e-30 : f32
      %99 = vector.broadcast %cst_53 : f32 to vector<1x256xf32>
      %100 = arith.maximumf %72, %99 : vector<1x256xf32>
      %101 = math.log %100 : vector<1x256xf32>
      %cst_54 = arith.constant 2.000000e-01 : f32
      %102 = vector.broadcast %cst_54 : f32 to vector<1x256xf32>
      %103 = arith.mulf %102, %101 : vector<1x256xf32>
      %104 = math.exp %103 : vector<1x256xf32>
      %105 = arith.mulf %83, %104 : vector<1x256xf32>
      %106 = vector.shape_cast %105 : vector<1x256xf32> to vector<1x1x256xf32>
      %cst_55 = arith.constant dense<0.000000e+00> : vector<1xf32>
      %107 = vector.multi_reduction <add>, %106, %cst_55 [1, 2] : vector<1x1x256xf32> to vector<1xf32>
      %108 = vector.shape_cast %107 : vector<1xf32> to vector<1x1x1xf32>
      %109 = vector.extract %108[0, 0, 0] : f32 from vector<1x1x1xf32>
      %110 = vector.broadcast %109 : f32 to vector<1x1xf32>
      %c0_56 = arith.constant 0 : index
      %c0_57 = arith.constant 0 : index
      %c0_58 = arith.constant 0 : index
      %c0_59 = arith.constant 0 : index
      %111 = vector.load %arg12[%c0_56, %c0_57, %c0_58, %c0_59] : memref<1x1x1x1xf32, #tpu.memory_space<vmem>>, vector<1x1x1x1xf32>
      %112 = vector.shape_cast %111 : vector<1x1x1x1xf32> to vector<1x1xf32>
      %113 = vector.shape_cast %110 : vector<1x1xf32> to vector<1x1x1x1xf32>
      tpu.vector_store %arg12[%c0_56, %c0_57, %c0_58, %c0_59], %113 {strides = array<i32>} : memref<1x1x1x1xf32, #tpu.memory_space<vmem>>, vector<1x1x1x1xf32>,
    } else {
    }
    return
  }
  func.func @transform_0(%arg0: i32, %arg1: i32, %arg2: i32) -> (i32, i32, i32) {
    %c0_i32 = arith.constant 0 : i32
    %c0_i32_0 = arith.constant 0 : i32
    return %arg0, %c0_i32, %arg1 : i32, i32, i32
  }
  func.func @transform_1(%arg0: i32, %arg1: i32, %arg2: i32) -> (i32, i32, i32) {
    %c0_i32 = arith.constant 0 : i32
    %c0_i32_0 = arith.constant 0 : i32
    return %arg0, %c0_i32, %arg1 : i32, i32, i32
  }
  func.func @transform_2(%arg0: i32, %arg1: i32, %arg2: i32) -> (i32, i32, i32) {
    %c0_i32 = arith.constant 0 : i32
    %c0_i32_0 = arith.constant 0 : i32
    %c0_i32_1 = arith.constant 0 : i32
    return %arg0, %c0_i32, %c0_i32_0 : i32, i32, i32
  }
  func.func @transform_3(%arg0: i32, %arg1: i32, %arg2: i32) -> (i32, i32, i32) {
    %c0_i32 = arith.constant 0 : i32
    %c0_i32_0 = arith.constant 0 : i32
    %c0_i32_1 = arith.constant 0 : i32
    return %arg0, %c0_i32, %c0_i32_0 : i32, i32, i32
  }
  func.func @transform_4(%arg0: i32, %arg1: i32, %arg2: i32) -> (i32, i32) {
    %c0_i32 = arith.constant 0 : i32
    %c0_i32_0 = arith.constant 0 : i32
    return %c0_i32, %arg1 : i32, i32
  }
  func.func @transform_5(%arg0: i32, %arg1: i32, %arg2: i32) -> (i32, i32) {
    %c0_i32 = arith.constant 0 : i32
    %c0_i32_0 = arith.constant 0 : i32
    return %c0_i32, %arg1 : i32, i32
  }
  func.func @transform_6(%arg0: i32, %arg1: i32, %arg2: i32) -> (i32, i32) {
    %c0_i32 = arith.constant 0 : i32
    %c0_i32_0 = arith.constant 0 : i32
    %c0_i32_1 = arith.constant 0 : i32
    return %c0_i32, %c0_i32_0 : i32, i32
  }
  func.func @transform_7(%arg0: i32, %arg1: i32, %arg2: i32) -> (i32, i32) {
    %c0_i32 = arith.constant 0 : i32
    %c0_i32_0 = arith.constant 0 : i32
    %c0_i32_1 = arith.constant 0 : i32
    return %c0_i32, %c0_i32_0 : i32, i32
  }
  func.func @transform_8(%arg0: i32, %arg1: i32, %arg2: i32) -> (i32, i32, i32, i32) {
    %c0_i32 = arith.constant 0 : i32
    %c0_i32_0 = arith.constant 0 : i32
    %c0_i32_1 = arith.constant 0 : i32
    return %arg0, %arg1, %c0_i32, %c0_i32_0 : i32, i32, i32, i32
  }
  func.func @transform_9(%arg0: i32, %arg1: i32, %arg2: i32) -> (i32, i32, i32, i32) {
    %c0_i32 = arith.constant 0 : i32
    %c0_i32_0 = arith.constant 0 : i32
    %c0_i32_1 = arith.constant 0 : i32
    return %arg0, %arg1, %c0_i32, %c0_i32_0 : i32, i32, i32, i32
  }
}

</mosaic_0001>

<llo_original>
// kernel: hausdorff_dt_loss.1
$region0: #{hausdorff_dt_loss.1}
  #allocation0 [shape = 'u32[]', space=smem, size = 0x4, offset = 0x4, fixed_abs, tag = 'smem constant byte address 0x4 - core index']
  #allocation1 [shape = 'u32[72,128]{1,0:T(1,128)}', space=vmem, size = 0x9000, scoped, tag = 'internal scratch']
  #allocation2 [shape = 'f32[8,256]{1,0:T(8,128)}', space=vmem, size = 0x2000, scoped, tag = 'scratch operand']
  #allocation3 [shape = 'f32[8,256]{1,0:T(8,128)}', space=vmem, size = 0x2000, scoped, tag = 'scratch operand']
  %s0 = inlined_call_operand.vmem [shape: f32[2,1,256], index: 0, kind: input, shape index: {}]
  %s1 = inlined_call_operand.vmem [shape: f32[2,1,256], index: 1, kind: input, shape index: {}]
  %s2 = inlined_call_operand.vmem [shape: f32[2,256,1], index: 2, kind: input, shape index: {}]
  %s3 = inlined_call_operand.vmem [shape: f32[2,256,1], index: 3, kind: input, shape index: {}]
  %s4 = inlined_call_operand.vmem [shape: f32[1,256], index: 4, kind: input, shape index: {}]
  %s5 = inlined_call_operand.vmem [shape: f32[1,256], index: 5, kind: input, shape index: {}]
  %s6 = inlined_call_operand.vmem [shape: f32[256,1], index: 6, kind: input, shape index: {}]
  %s7 = inlined_call_operand.vmem [shape: f32[256,1], index: 7, kind: input, shape index: {}]
  %s8 = inlined_call_operand.vmem [shape: f32[2,1,1,1], index: 8, kind: output, shape index: {0}]
  %s9 = inlined_call_operand.vmem [shape: f32[2,1,1,1], index: 9, kind: output, shape index: {1}]
  %10 = xla_tuple %s8, %s9
  %s11 = sld [smem:[#allocation0]]
  $region81: #{hausdorff_dt_loss.1} parent=0
    _
  %s13 = ssub.s32 1, %s11
  %s14 = scalar_select 0, %s13, %s11
  loop: start=0, step=1, limit=4
  $region2: #{hausdorff_dt_loss.1} parent=0 // loop_pre_header
    _
  $region3: #{hausdorff_dt_loss.1} parent=0 // loop_header
    %s16 = sphi 0, %s20
    %p17 = scmp.ge.s32.totalorder %s16, 4
    %s23 = sphi 0, %s42
    %s24 = sphi 0, %s38
    %s25 = sphi 0, %s34
    %s26 = sphi 0, %s23
    %s27 = sphi 0, %s24
    %s28 = sphi 0, %s25
    %s29 = sphi 0, %s26
    %s30 = sphi 0, %s27
    %s31 = sphi 0, %s28
    %s47 = sphi 0, %s49
    %s50 = sphi 0, %s47
    %s51 = sphi 0, %s50
    %s67 = sphi 0, %s51
    %s75 = sphi 0, %s77
    %s78 = sphi 0, %s75
    %s79 = sphi 0, %s78
    %s95 = sphi 0, %s79
    %s101 = sphi 0, %s103
    %s104 = sphi 0, %s101
    %s105 = sphi 0, %s104
    %s121 = sphi 0, %s105
    %s127 = sphi 0, %s129
    %s130 = sphi 0, %s127
    %s131 = sphi 0, %s130
    %s147 = sphi 0, %s131
    %s153 = sphi 0, %s155
    %s156 = sphi 0, %s153
    %s157 = sphi 0, %s156
    %s173 = sphi 0, %s157
    %s179 = sphi 0, %s181
    %s182 = sphi 0, %s179
    %s183 = sphi 0, %s182
    %s199 = sphi 0, %s183
    %s203 = sphi 0, %s203
    %s205 = sphi 0, %s203
    %s206 = sphi 0, %s205
    %s220 = sphi 0, %s206
    %s224 = sphi 0, %s224
    %s226 = sphi 0, %s224
    %s227 = sphi 0, %s226
    %s241 = sphi 0, %s227
    %s249 = sphi 0, %s251
    %s252 = sphi 0, %s249
    %s253 = sphi 0, %s252
    %s269 = sphi 0, %s253
    %s277 = sphi 0, %s279
    %s280 = sphi 0, %s277
    %s281 = sphi 0, %s280
    %s297 = sphi 0, %s281
  $region4: #{hausdorff_dt_loss.1} parent=0 // loop_header_branch
    %19 = sbr.rel (%p17) target = $region8
  $region5: #{hausdorff_dt_loss.1} parent=0 // loop_body
    %s21 = ssub.s32 %s16, 1
    %s22 = ssub.s32 %s16, 2
    %s32 = sadd.s32 1, %s25
    %p33 = scmp.ge.s32.totalorder %s32, 1
    %s34 = scalar_select %p33, 0, %s32
    %s35 = sadd.s32 1, %s24
    %s36 = scalar_select %p33, %s35, %s24
    %p37 = scmp.ge.s32.totalorder %s36, 1
    %s38 = scalar_select %p37, 0, %s36
    %s39 = sadd.s32 1, %s23
    %s40 = scalar_select %p37, %s39, %s23
    %p41 = scmp.ge.s32.totalorder %s40, 2
    %s42 = scalar_select %p41, 0, %s40
    %s43 = ssub.s32 %s23, %s42
    %s44 = ssub.s32 %s24, %s38
    %s45 = sor.u32 %s43, %s44
    %p46 = scmp.eq.s32.totalorder %s45, 0
    %s48 = sadd.s32 %s47, 1
    %s49 = scalar_select %p46, %s47, %s48
    %p52 = pneg %p46
    %p53 = scmp.eq.s32.totalorder %s16, 1
    %p54 = por %p52, %p53
    %p55 = scmp.ne.s32.totalorder %s47, %s50
    %p56 = scmp.eq.s32.totalorder %s16, 0
    %p57 = por %p55, %p56
    %p58 = scmp.ne.s32.totalorder %s47, %s50
    %p59 = scmp.eq.s32.totalorder %s21, 1
    %p60 = por %p58, %p59
    %p61 = scmp.ne.s32.totalorder %s50, %s51
    %p62 = scmp.eq.s32.totalorder %s21, 0
    %p63 = por %p61, %p62
    %p64 = scmp.ne.s32.totalorder %s50, %s51
    %p65 = scmp.eq.s32.totalorder %s22, 1
    %p66 = por %p64, %p65
    %p68 = scmp.ne.s32.totalorder %s51, %s67
    %p69 = scmp.eq.s32.totalorder %s22, 0
    %p70 = por %p68, %p69
    %s71 = ssub.s32 %s23, %s42
    %s72 = ssub.s32 %s24, %s38
    %s73 = sor.u32 %s71, %s72
    %p74 = scmp.eq.s32.totalorder %s73, 0
    %s76 = sadd.s32 %s75, 1
    %s77 = scalar_select %p74, %s75, %s76
    %p80 = pneg %p74
    %p81 = scmp.eq.s32.totalorder %s16, 1
    %p82 = por %p80, %p81
    %p83 = scmp.ne.s32.totalorder %s75, %s78
    %p84 = scmp.eq.s32.totalorder %s16, 0
    %p85 = por %p83, %p84
    %p86 = scmp.ne.s32.totalorder %s75, %s78
    %p87 = scmp.eq.s32.totalorder %s21, 1
    %p88 = por %p86, %p87
    %p89 = scmp.ne.s32.totalorder %s78, %s79
    %p90 = scmp.eq.s32.totalorder %s21, 0
    %p91 = por %p89, %p90
    %p92 = scmp.ne.s32.totalorder %s78, %s79
    %p93 = scmp.eq.s32.totalorder %s22, 1
    %p94 = por %p92, %p93
    %p96 = scmp.ne.s32.totalorder %s79, %s95
    %p97 = scmp.eq.s32.totalorder %s22, 0
    %p98 = por %p96, %p97
    %s99 = ssub.s32 %s23, %s42
    %p100 = scmp.eq.s32.totalorder %s99, 0
    %s102 = sadd.s32 %s101, 1
    %s103 = scalar_select %p100, %s101, %s102
    %p106 = pneg %p100
    %p107 = scmp.eq.s32.totalorder %s16, 1
    %p108 = por %p106, %p107
    %p109 = scmp.ne.s32.totalorder %s101, %s104
    %p110 = scmp.eq.s32.totalorder %s16, 0
    %p111 = por %p109, %p110
    %p112 = scmp.ne.s32.totalorder %s101, %s104
    %p113 = scmp.eq.s32.totalorder %s21, 1
    %p114 = por %p112, %p113
    %p115 = scmp.ne.s32.totalorder %s104, %s105
    %p116 = scmp.eq.s32.totalorder %s21, 0
    %p117 = por %p115, %p116
    %p118 = scmp.ne.s32.totalorder %s104, %s105
    %p119 = scmp.eq.s32.totalorder %s22, 1
    %p120 = por %p118, %p119
    %p122 = scmp.ne.s32.totalorder %s105, %s121
    %p123 = scmp.eq.s32.totalorder %s22, 0
    %p124 = por %p122, %p123
    %s125 = ssub.s32 %s23, %s42
    %p126 = scmp.eq.s32.totalorder %s125, 0
    %s128 = sadd.s32 %s127, 1
    %s129 = scalar_select %p126, %s127, %s128
    %p132 = pneg %p126
    %p133 = scmp.eq.s32.totalorder %s16, 1
    %p134 = por %p132, %p133
    %p135 = scmp.ne.s32.totalorder %s127, %s130
    %p136 = scmp.eq.s32.totalorder %s16, 0
    %p137 = por %p135, %p136
    %p138 = scmp.ne.s32.totalorder %s127, %s130
    %p139 = scmp.eq.s32.totalorder %s21, 1
    %p140 = por %p138, %p139
    %p141 = scmp.ne.s32.totalorder %s130, %s131
    %p142 = scmp.eq.s32.totalorder %s21, 0
    %p143 = por %p141, %p142
    %p144 = scmp.ne.s32.totalorder %s130, %s131
    %p145 = scmp.eq.s32.totalorder %s22, 1
    %p146 = por %p144, %p145
    %p148 = scmp.ne.s32.totalorder %s131, %s147
    %p149 = scmp.eq.s32.totalorder %s22, 0
    %p150 = por %p148, %p149
    %s151 = ssub.s32 %s24, %s38
    %p152 = scmp.eq.s32.totalorder %s151, 0
    %s154 = sadd.s32 %s153, 1
    %s155 = scalar_select %p152, %s153, %s154
    %p158 = pneg %p152
    %p159 = scmp.eq.s32.totalorder %s16, 1
    %p160 = por %p158, %p159
    %p161 = scmp.ne.s32.totalorder %s153, %s156
    %p162 = scmp.eq.s32.totalorder %s16, 0
    %p163 = por %p161, %p162
    %p164 = scmp.ne.s32.totalorder %s153, %s156
    %p165 = scmp.eq.s32.totalorder %s21, 1
    %p166 = por %p164, %p165
    %p167 = scmp.ne.s32.totalorder %s156, %s157
    %p168 = scmp.eq.s32.totalorder %s21, 0
    %p169 = por %p167, %p168
    %p170 = scmp.ne.s32.totalorder %s156, %s157
    %p171 = scmp.eq.s32.totalorder %s22, 1
    %p172 = por %p170, %p171
    %p174 = scmp.ne.s32.totalorder %s157, %s173
    %p175 = scmp.eq.s32.totalorder %s22, 0
    %p176 = por %p174, %p175
    %s177 = ssub.s32 %s24, %s38
    %p178 = scmp.eq.s32.totalorder %s177, 0
    %s180 = sadd.s32 %s179, 1
    %s181 = scalar_select %p178, %s179, %s180
    %p184 = pneg %p178
    %p185 = scmp.eq.s32.totalorder %s16, 1
    %p186 = por %p184, %p185
    %p187 = scmp.ne.s32.totalorder %s179, %s182
    %p188 = scmp.eq.s32.totalorder %s16, 0
    %p189 = por %p187, %p188
    %p190 = scmp.ne.s32.totalorder %s179, %s182
    %p191 = scmp.eq.s32.totalorder %s21, 1
    %p192 = por %p190, %p191
    %p193 = scmp.ne.s32.totalorder %s182, %s183
    %p194 = scmp.eq.s32.totalorder %s21, 0
    %p195 = por %p193, %p194
    %p196 = scmp.ne.s32.totalorder %s182, %s183
    %p197 = scmp.eq.s32.totalorder %s22, 1
    %p198 = por %p196, %p197
    %p200 = scmp.ne.s32.totalorder %s183, %s199
    %p201 = scmp.eq.s32.totalorder %s22, 0
    %p202 = por %p200, %p201
    %s204 = sadd.s32 %s203, 1
    %p207 = scmp.eq.s32.totalorder %s16, 1
    %p208 = scmp.ne.s32.totalorder %s203, %s205
    %p209 = scmp.eq.s32.totalorder %s16, 0
    %p210 = por %p208, %p209
    %p211 = scmp.ne.s32.totalorder %s203, %s205
    %p212 = scmp.eq.s32.totalorder %s21, 1
    %p213 = por %p211, %p212
    %p214 = scmp.ne.s32.totalorder %s205, %s206
    %p215 = scmp.eq.s32.totalorder %s21, 0
    %p216 = por %p214, %p215
    %p217 = scmp.ne.s32.totalorder %s205, %s206
    %p218 = scmp.eq.s32.totalorder %s22, 1
    %p219 = por %p217, %p218
    %p221 = scmp.ne.s32.totalorder %s206, %s220
    %p222 = scmp.eq.s32.totalorder %s22, 0
    %p223 = por %p221, %p222
    %s225 = sadd.s32 %s224, 1
    %p228 = scmp.eq.s32.totalorder %s16, 1
    %p229 = scmp.ne.s32.totalorder %s224, %s226
    %p230 = scmp.eq.s32.totalorder %s16, 0
    %p231 = por %p229, %p230
    %p232 = scmp.ne.s32.totalorder %s224, %s226
    %p233 = scmp.eq.s32.totalorder %s21, 1
    %p234 = por %p232, %p233
    %p235 = scmp.ne.s32.totalorder %s226, %s227
    %p236 = scmp.eq.s32.totalorder %s21, 0
    %p237 = por %p235, %p236
    %p238 = scmp.ne.s32.totalorder %s226, %s227
    %p239 = scmp.eq.s32.totalorder %s22, 1
    %p240 = por %p238, %p239
    %p242 = scmp.ne.s32.totalorder %s227, %s241
    %p243 = scmp.eq.s32.totalorder %s22, 0
    %p244 = por %p242, %p243
    %s245 = ssub.s32 %s23, %s42
    %s246 = ssub.s32 %s24, %s38
    %s247 = sor.u32 %s245, %s246
    %p248 = scmp.eq.s32.totalorder %s247, 0
    %s250 = sadd.s32 %s249, 1
    %s251 = scalar_select %p248, %s249, %s250
    %p254 = pneg %p248
    %p255 = scmp.eq.s32.totalorder %s16, 1
    %p256 = por %p254, %p255
    %p257 = scmp.ne.s32.totalorder %s249, %s252
    %p258 = scmp.eq.s32.totalorder %s16, 0
    %p259 = por %p257, %p258
    %p260 = scmp.ne.s32.totalorder %s249, %s252
    %p261 = scmp.eq.s32.totalorder %s21, 1
    %p262 = por %p260, %p261
    %p263 = scmp.ne.s32.totalorder %s252, %s253
    %p264 = scmp.eq.s32.totalorder %s21, 0
    %p265 = por %p263, %p264
    %p266 = scmp.ne.s32.totalorder %s252, %s253
    %p267 = scmp.eq.s32.totalorder %s22, 1
    %p268 = por %p266, %p267
    %p270 = scmp.ne.s32.totalorder %s253, %s269
    %p271 = scmp.eq.s32.totalorder %s22, 0
    %p272 = por %p270, %p271
    %s273 = ssub.s32 %s23, %s42
    %s274 = ssub.s32 %s24, %s38
    %s275 = sor.u32 %s273, %s274
    %p276 = scmp.eq.s32.totalorder %s275, 0
    %s278 = sadd.s32 %s277, 1
    %s279 = scalar_select %p276, %s277, %s278
    %p282 = pneg %p276
    %p283 = scmp.eq.s32.totalorder %s16, 1
    %p284 = por %p282, %p283
    %p285 = scmp.ne.s32.totalorder %s277, %s280
    %p286 = scmp.eq.s32.totalorder %s16, 0
    %p287 = por %p285, %p286
    %p288 = scmp.ne.s32.totalorder %s277, %s280
    %p289 = scmp.eq.s32.totalorder %s21, 1
    %p290 = por %p288, %p289
    %p291 = scmp.ne.s32.totalorder %s280, %s281
    %p292 = scmp.eq.s32.totalorder %s21, 0
    %p293 = por %p291, %p292
    %p294 = scmp.ne.s32.totalorder %s280, %s281
    %p295 = scmp.eq.s32.totalorder %s22, 1
    %p296 = por %p294, %p295
    %p298 = scmp.ne.s32.totalorder %s281, %s297
    %p299 = scmp.eq.s32.totalorder %s22, 0
    %p300 = por %p298, %p299
    %p301 = scmp.le.s32.totalorder 1, %s16
    %p302 = scmp.lt.s32.totalorder %s16, 3
    %p303 = pnand %p301, %p302
    %p304 = pneg %p303
    // Predicated region
    $region9: #{hausdorff_dt_loss.1} parent=5 // pred_check
      _
    $region10: #{hausdorff_dt_loss.1} parent=5 // pred_check_branch
      %306 = sbr.rel (%p303) target = $region12
    $region11: #{hausdorff_dt_loss.1} parent=5 // pred_region
      %s307 = ssub.s32 %s16, 1
      // Predicated region
      $region13: #{hausdorff_dt_loss.1} parent=11 // pred_check
        %p308 = pneg %p169
      $region14: #{hausdorff_dt_loss.1} parent=11 // pred_check_branch
        %310 = sbr.rel (%p308) target = $region16
      $region15: #{hausdorff_dt_loss.1} parent=11 // pred_region
        %s311 = smul.u32 2, %s27
        %p312 = scmp.lt.s32.totalorder %s311, 1
        %s313 = scalar_select %p312, %s311, 1
        %s314 = scalar_lea.vmem %s4, %s313
        %s315 = smul.u32 2, %s27
      $region16: #{hausdorff_dt_loss.1} parent=11 // pred_fallthru
        _
      // Predicated region
      $region17: #{hausdorff_dt_loss.1} parent=11 // pred_check
        %p316 = pneg %p195
      $region18: #{hausdorff_dt_loss.1} parent=11 // pred_check_branch
        %318 = sbr.rel (%p316) target = $region20
      $region19: #{hausdorff_dt_loss.1} parent=11 // pred_region
        %s319 = smul.u32 2, %s27
        %p320 = scmp.lt.s32.totalorder %s319, 1
        %s321 = scalar_select %p320, %s319, 1
        %s322 = scalar_lea.vmem %s5, %s321
        %s323 = smul.u32 2, %s27
      $region20: #{hausdorff_dt_loss.1} parent=11 // pred_fallthru
        _
      // Predicated region
      $region21: #{hausdorff_dt_loss.1} parent=11 // pred_check
        %p324 = pneg %p216
      $region22: #{hausdorff_dt_loss.1} parent=11 // pred_check_branch
        %326 = sbr.rel (%p324) target = $region24
      $region23: #{hausdorff_dt_loss.1} parent=11 // pred_region
        _
      $region24: #{hausdorff_dt_loss.1} parent=11 // pred_fallthru
        _
      // Predicated region
      $region25: #{hausdorff_dt_loss.1} parent=11 // pred_check
        %p327 = pneg %p237
      $region26: #{hausdorff_dt_loss.1} parent=11 // pred_check_branch
        %329 = sbr.rel (%p327) target = $region28
      $region27: #{hausdorff_dt_loss.1} parent=11 // pred_region
        _
      $region28: #{hausdorff_dt_loss.1} parent=11 // pred_fallthru
        _
    $region12: #{hausdorff_dt_loss.1} parent=5 // pred_fallthru
      _
    %p330 = scmp.lt.s32.totalorder %s16, 2
    // Predicated region
    $region29: #{hausdorff_dt_loss.1} parent=5 // pred_check
      %p331 = pneg %p330
    $region30: #{hausdorff_dt_loss.1} parent=5 // pred_check_branch
      %333 = sbr.rel (%p331) target = $region32
    $region31: #{hausdorff_dt_loss.1} parent=5 // pred_region
      // Predicated region
      $region33: #{hausdorff_dt_loss.1} parent=31 // pred_check
        %p334 = pneg %p57
      $region34: #{hausdorff_dt_loss.1} parent=31 // pred_check_branch
        %336 = sbr.rel (%p334) target = $region36
      $region35: #{hausdorff_dt_loss.1} parent=31 // pred_region
        %s337 = smul.u32 2, %s24
        %p338 = scmp.lt.s32.totalorder %s23, 1
        %s339 = scalar_select %p338, %s23, 1
        %p340 = scmp.lt.s32.totalorder %s337, 1
        %s341 = scalar_select %p340, %s337, 1
        %s342 = smul.addr %s339, 2
        %s343 = sadd.s32 %s341, %s342
        %s344 = scalar_lea.vmem %s0, %s343
        %s345 = smul.u32 2, %s24
      $region36: #{hausdorff_dt_loss.1} parent=31 // pred_fallthru
        _
      // Predicated region
      $region37: #{hausdorff_dt_loss.1} parent=31 // pred_check
        %p346 = pneg %p85
      $region38: #{hausdorff_dt_loss.1} parent=31 // pred_check_branch
        %348 = sbr.rel (%p346) target = $region40
      $region39: #{hausdorff_dt_loss.1} parent=31 // pred_region
        %s349 = smul.u32 2, %s24
        %p350 = scmp.lt.s32.totalorder %s23, 1
        %s351 = scalar_select %p350, %s23, 1
        %p352 = scmp.lt.s32.totalorder %s349, 1
        %s353 = scalar_select %p352, %s349, 1
        %s354 = smul.addr %s351, 2
        %s355 = sadd.s32 %s353, %s354
        %s356 = scalar_lea.vmem %s1, %s355
        %s357 = smul.u32 2, %s24
      $region40: #{hausdorff_dt_loss.1} parent=31 // pred_fallthru
        _
      // Predicated region
      $region41: #{hausdorff_dt_loss.1} parent=31 // pred_check
        %p358 = pneg %p111
      $region42: #{hausdorff_dt_loss.1} parent=31 // pred_check_branch
        %360 = sbr.rel (%p358) target = $region44
      $region43: #{hausdorff_dt_loss.1} parent=31 // pred_region
        %p361 = scmp.lt.s32.totalorder %s23, 1
        %s362 = scalar_select %p361, %s23, 1
        %s363 = smul.addr %s362, 32
        %s364 = smul.addr %s363, 8
        %s365 = scalar_lea.vmem %s2, %s364
      $region44: #{hausdorff_dt_loss.1} parent=31 // pred_fallthru
        _
      // Predicated region
      $region45: #{hausdorff_dt_loss.1} parent=31 // pred_check
        %p366 = pneg %p137
      $region46: #{hausdorff_dt_loss.1} parent=31 // pred_check_branch
        %368 = sbr.rel (%p366) target = $region48
      $region47: #{hausdorff_dt_loss.1} parent=31 // pred_region
        %p369 = scmp.lt.s32.totalorder %s23, 1
        %s370 = scalar_select %p369, %s23, 1
        %s371 = smul.addr %s370, 32
        %s372 = smul.addr %s371, 8
        %s373 = scalar_lea.vmem %s3, %s372
      $region48: #{hausdorff_dt_loss.1} parent=31 // pred_fallthru
        _
    $region32: #{hausdorff_dt_loss.1} parent=5 // pred_fallthru
      _
    %p374 = scmp.le.s32.totalorder 1, %s16
    %p375 = scmp.lt.s32.totalorder %s16, 3
    %p376 = pnand %p374, %p375
    %p377 = pneg %p376
    // Predicated region
    $region49: #{hausdorff_dt_loss.1} parent=5 // pred_check
      _
    $region50: #{hausdorff_dt_loss.1} parent=5 // pred_check_branch
      %379 = sbr.rel (%p376) target = $region52
    $region51: #{hausdorff_dt_loss.1} parent=5 // pred_region
      %s380 = ssub.s32 %s16, 1
      %s381 = smul.u32 2, %s27
      %p382 = scmp.lt.s32.totalorder %s26, 1
      %s383 = scalar_select %p382, %s26, 1
      %p384 = scmp.lt.s32.totalorder %s381, 1
      %s385 = scalar_select %p384, %s381, 1
      %s386 = smul.addr %s383, 2
      %s387 = sadd.s32 %s385, %s386
      %s388 = scalar_lea.vmem %s0, %s387
      %p389 = pneg %p63
      %p390 = pneg %p60
      %s391 = smul.u32 2, %s27
      %p392 = scmp.lt.s32.totalorder %s26, 1
      %s393 = scalar_select %p392, %s26, 1
      %p394 = scmp.lt.s32.totalorder %s391, 1
      %s395 = scalar_select %p394, %s391, 1
      %s396 = smul.addr %s393, 2
      %s397 = sadd.s32 %s395, %s396
      %s398 = scalar_lea.vmem %s1, %s397
      %p399 = pneg %p91
      %p400 = pneg %p88
      %p401 = scmp.lt.s32.totalorder %s26, 1
      %s402 = scalar_select %p401, %s26, 1
      %s403 = smul.addr %s402, 32
      %s404 = smul.addr %s403, 8
      %s405 = scalar_lea.vmem %s2, %s404
      %p406 = pneg %p117
      %p407 = pneg %p114
      %p408 = scmp.lt.s32.totalorder %s26, 1
      %s409 = scalar_select %p408, %s26, 1
      %s410 = smul.addr %s409, 32
      %s411 = smul.addr %s410, 8
      %s412 = scalar_lea.vmem %s3, %s411
      %p413 = pneg %p143
      %p414 = pneg %p140
      %s415 = smul.u32 2, %s27
      %p416 = scmp.lt.s32.totalorder %s415, 1
      %s417 = scalar_select %p416, %s415, 1
      %s418 = scalar_lea.vmem %s4, %s417
      %p419 = pneg %p169
      %p420 = pneg %p166
      %s421 = smul.u32 2, %s27
      %p422 = scmp.lt.s32.totalorder %s421, 1
      %s423 = scalar_select %p422, %s421, 1
      %s424 = scalar_lea.vmem %s5, %s423
      %p425 = pneg %p195
      %p426 = pneg %p192
      %p427 = pneg %p216
      %p428 = pneg %p213
      %p429 = pneg %p237
      %p430 = pneg %p234
      %p431 = pneg %p265
      %p432 = pneg %p262
      %p433 = scmp.lt.s32.totalorder %s26, 1
      %s434 = scalar_select %p433, %s26, 1
      %p435 = scmp.lt.s32.totalorder %s27, 0
      %s436 = scalar_select %p435, %s27, 0
      %s437 = sadd.s32 %s436, %s434
      %s438 = scalar_lea.vmem %s8, %s437
      %p439 = pneg %p293
      %p440 = pneg %p290
      %p441 = scmp.lt.s32.totalorder %s26, 1
      %s442 = scalar_select %p441, %s26, 1
      %p443 = scmp.lt.s32.totalorder %s27, 0
      %s444 = scalar_select %p443, %s27, 0
      %s445 = sadd.s32 %s444, %s442
      %s446 = scalar_lea.vmem %s9, %s445
      %s447 = smul.u32 2, %s27
      %p448 = scmp.lt.s32.totalorder %s26, 1
      %s449 = scalar_select %p448, %s26, 1
      %p450 = scmp.lt.s32.totalorder %s447, 1
      %s451 = scalar_select %p450, %s447, 1
      %s452 = smul.addr %s449, 2
      %s453 = sadd.s32 %s451, %s452
      %s454 = scalar_lea.vmem %s0, %s453
      %s455 = smul.u32 2, %s27
      %s456 = smul.u32 2, %s27
      %p457 = scmp.lt.s32.totalorder %s26, 1
      %s458 = scalar_select %p457, %s26, 1
      %p459 = scmp.lt.s32.totalorder %s456, 1
      %s460 = scalar_select %p459, %s456, 1
      %s461 = smul.addr %s458, 2
      %s462 = sadd.s32 %s460, %s461
      %s463 = scalar_lea.vmem %s1, %s462
      %s464 = smul.u32 2, %s27
      %p465 = scmp.lt.s32.totalorder %s26, 1
      %s466 = scalar_select %p465, %s26, 1
      %s467 = smul.addr %s466, 32
      %s468 = smul.addr %s467, 8
      %s469 = scalar_lea.vmem %s2, %s468
      %p470 = scmp.lt.s32.totalorder %s26, 1
      %s471 = scalar_select %p470, %s26, 1
      %s472 = smul.addr %s471, 32
      %s473 = smul.addr %s472, 8
      %s474 = scalar_lea.vmem %s3, %s473
      %s475 = smul.u32 2, %s27
      %p476 = scmp.lt.s32.totalorder %s475, 1
      %s477 = scalar_select %p476, %s475, 1
      %s478 = scalar_lea.vmem %s4, %s477
      %s479 = smul.u32 2, %s27
      %s480 = smul.u32 2, %s27
      %p481 = scmp.lt.s32.totalorder %s480, 1
      %s482 = scalar_select %p481, %s480, 1
      %s483 = scalar_lea.vmem %s5, %s482
      %s484 = smul.u32 2, %s27
      %p485 = scmp.lt.s32.totalorder %s26, 1
      %s486 = scalar_select %p485, %s26, 1
      %p487 = scmp.lt.s32.totalorder %s27, 0
      %s488 = scalar_select %p487, %s27, 0
      %s489 = sadd.s32 %s488, %s486
      %s490 = scalar_lea.vmem %s8, %s489
      %p491 = scmp.lt.s32.totalorder %s26, 1
      %s492 = scalar_select %p491, %s26, 1
      %p493 = scmp.lt.s32.totalorder %s27, 0
      %s494 = scalar_select %p493, %s27, 0
      %s495 = sadd.s32 %s494, %s492
      %s496 = scalar_lea.vmem %s9, %s495
      %p497 = scmp.eq.s32.totalorder %s28, 0
      // Predicated region
      $region53: #{hausdorff_dt_loss.1} parent=51 // pred_check
        %p498 = pneg %p497
      $region54: #{hausdorff_dt_loss.1} parent=51 // pred_check_branch
        %500 = sbr.rel (%p498) target = $region56
      $region55: #{hausdorff_dt_loss.1} parent=51 // pred_region
        %501 = vst [vmem:[#allocation2] sm:$0xff] 1e+20
        %502 = vst [vmem:[#allocation2 + $0x8] sm:$0xff] 1e+20
        %503 = vst [vmem:[#allocation3] sm:$0xff] 1e+20
        %504 = vst [vmem:[#allocation3 + $0x8] sm:$0xff] 1e+20
      $region56: #{hausdorff_dt_loss.1} parent=51 // pred_fallthru
        _
      %s505 = smul.u32 %s28, 256
      %s506 = scalar_lea.vmem %s6, %s505
      %v507 = vld [vmem:[%s506] sm:$0xff]
      %v508 = vld [vmem:[%s506 + $0x8] sm:$0xff]
      %v509 = vld [vmem:[%s506 + $0x10] sm:$0xff]
      %v510 = vld [vmem:[%s506 + $0x18] sm:$0xff]
      %v511 = vld [vmem:[%s506 + $0x20] sm:$0xff]
      %v512 = vld [vmem:[%s506 + $0x28] sm:$0xff]
      %v513 = vld [vmem:[%s506 + $0x30] sm:$0xff]
      %v514 = vld [vmem:[%s506 + $0x38] sm:$0xff]
      %v515 = vld [vmem:[%s506 + $0x40] sm:$0xff]
      %v516 = vld [vmem:[%s506 + $0x48] sm:$0xff]
      %v517 = vld [vmem:[%s506 + $0x50] sm:$0xff]
      %v518 = vld [vmem:[%s506 + $0x58] sm:$0xff]
      %v519 = vld [vmem:[%s506 + $0x60] sm:$0xff]
      %v520 = vld [vmem:[%s506 + $0x68] sm:$0xff]
      %v521 = vld [vmem:[%s506 + $0x70] sm:$0xff]
      %v522 = vld [vmem:[%s506 + $0x78] sm:$0xff]
      %v523 = vld [vmem:[%s506 + $0x80] sm:$0xff]
      %v524 = vld [vmem:[%s506 + $0x88] sm:$0xff]
      %v525 = vld [vmem:[%s506 + $0x90] sm:$0xff]
      %v526 = vld [vmem:[%s506 + $0x98] sm:$0xff]
      %v527 = vld [vmem:[%s506 + $0xa0] sm:$0xff]
      %v528 = vld [vmem:[%s506 + $0xa8] sm:$0xff]
      %v529 = vld [vmem:[%s506 + $0xb0] sm:$0xff]
      %v530 = vld [vmem:[%s506 + $0xb8] sm:$0xff]
      %v531 = vld [vmem:[%s506 + $0xc0] sm:$0xff]
      %v532 = vld [vmem:[%s506 + $0xc8] sm:$0xff]
      %v533 = vld [vmem:[%s506 + $0xd0] sm:$0xff]
      %v534 = vld [vmem:[%s506 + $0xd8] sm:$0xff]
      %v535 = vld [vmem:[%s506 + $0xe0] sm:$0xff]
      %v536 = vld [vmem:[%s506 + $0xe8] sm:$0xff]
      %v537 = vld [vmem:[%s506 + $0xf0] sm:$0xff]
      %v538 = vld [vmem:[%s506 + $0xf8] sm:$0xff]
      %s539 = scalar_lea.vmem %s7, %s505
      %v540 = vld [vmem:[%s539] sm:$0xff]
      %v541 = vld [vmem:[%s539 + $0x8] sm:$0xff]
      %v542 = vld [vmem:[%s539 + $0x10] sm:$0xff]
      %v543 = vld [vmem:[%s539 + $0x18] sm:$0xff]
      %v544 = vld [vmem:[%s539 + $0x20] sm:$0xff]
      %v545 = vld [vmem:[%s539 + $0x28] sm:$0xff]
      %v546 = vld [vmem:[%s539 + $0x30] sm:$0xff]
      %v547 = vld [vmem:[%s539 + $0x38] sm:$0xff]
      %v548 = vld [vmem:[%s539 + $0x40] sm:$0xff]
      %v549 = vld [vmem:[%s539 + $0x48] sm:$0xff]
      %v550 = vld [vmem:[%s539 + $0x50] sm:$0xff]
      %v551 = vld [vmem:[%s539 + $0x58] sm:$0xff]
      %v552 = vld [vmem:[%s539 + $0x60] sm:$0xff]
      %v553 = vld [vmem:[%s539 + $0x68] sm:$0xff]
      %v554 = vld [vmem:[%s539 + $0x70] sm:$0xff]
      %v555 = vld [vmem:[%s539 + $0x78] sm:$0xff]
      %v556 = vld [vmem:[%s539 + $0x80] sm:$0xff]
      %v557 = vld [vmem:[%s539 + $0x88] sm:$0xff]
      %v558 = vld [vmem:[%s539 + $0x90] sm:$0xff]
      %v559 = vld [vmem:[%s539 + $0x98] sm:$0xff]
      %v560 = vld [vmem:[%s539 + $0xa0] sm:$0xff]
      %v561 = vld [vmem:[%s539 + $0xa8] sm:$0xff]
      %v562 = vld [vmem:[%s539 + $0xb0] sm:$0xff]
      %v563 = vld [vmem:[%s539 + $0xb8] sm:$0xff]
      %v564 = vld [vmem:[%s539 + $0xc0] sm:$0xff]
      %v565 = vld [vmem:[%s539 + $0xc8] sm:$0xff]
      %v566 = vld [vmem:[%s539 + $0xd0] sm:$0xff]
      %v567 = vld [vmem:[%s539 + $0xd8] sm:$0xff]
      %v568 = vld [vmem:[%s539 + $0xe0] sm:$0xff]
      %v569 = vld [vmem:[%s539 + $0xe8] sm:$0xff]
      %v570 = vld [vmem:[%s539 + $0xf0] sm:$0xff]
      %v571 = vld [vmem:[%s539 + $0xf8] sm:$0xff]
      %s572 = scalar_lea.vmem %s469, %s505
      %v573 = vld [vmem:[%s572] sm:$0xff]
      %v574 = vld [vmem:[%s572 + $0x8] sm:$0xff]
      %v575 = vld [vmem:[%s572 + $0x10] sm:$0xff]
      %v576 = vld [vmem:[%s572 + $0x18] sm:$0xff]
      %v577 = vld [vmem:[%s572 + $0x20] sm:$0xff]
      %v578 = vld [vmem:[%s572 + $0x28] sm:$0xff]
      %v579 = vld [vmem:[%s572 + $0x30] sm:$0xff]
      %v580 = vld [vmem:[%s572 + $0x38] sm:$0xff]
      %v581 = vld [vmem:[%s572 + $0x40] sm:$0xff]
      %v582 = vld [vmem:[%s572 + $0x48] sm:$0xff]
      %v583 = vld [vmem:[%s572 + $0x50] sm:$0xff]
      %v584 = vld [vmem:[%s572 + $0x58] sm:$0xff]
      %v585 = vld [vmem:[%s572 + $0x60] sm:$0xff]
      %v586 = vld [vmem:[%s572 + $0x68] sm:$0xff]
      %v587 = vld [vmem:[%s572 + $0x70] sm:$0xff]
      %v588 = vld [vmem:[%s572 + $0x78] sm:$0xff]
      %v589 = vld [vmem:[%s572 + $0x80] sm:$0xff]
      %v590 = vld [vmem:[%s572 + $0x88] sm:$0xff]
      %v591 = vld [vmem:[%s572 + $0x90] sm:$0xff]
      %v592 = vld [vmem:[%s572 + $0x98] sm:$0xff]
      %v593 = vld [vmem:[%s572 + $0xa0] sm:$0xff]
      %v594 = vld [vmem:[%s572 + $0xa8] sm:$0xff]
      %v595 = vld [vmem:[%s572 + $0xb0] sm:$0xff]
      %v596 = vld [vmem:[%s572 + $0xb8] sm:$0xff]
      %v597 = vld [vmem:[%s572 + $0xc0] sm:$0xff]
      %v598 = vld [vmem:[%s572 + $0xc8] sm:$0xff]
      %v599 = vld [vmem:[%s572 + $0xd0] sm:$0xff]
      %v600 = vld [vmem:[%s572 + $0xd8] sm:$0xff]
      %v601 = vld [vmem:[%s572 + $0xe0] sm:$0xff]
      %v602 = vld [vmem:[%s572 + $0xe8] sm:$0xff]
      %v603 = vld [vmem:[%s572 + $0xf0] sm:$0xff]
      %v604 = vld [vmem:[%s572 + $0xf8] sm:$0xff]
      %vm605 = vcmp.gt.f32.partialorder %v573, 0.0
      %vm606 = vcmp.gt.f32.partialorder %v574, 0.0
      %vm607 = vcmp.gt.f32.partialorder %v575, 0.0
      %vm608 = vcmp.gt.f32.partialorder %v576, 0.0
      %vm609 = vcmp.gt.f32.partialorder %v577, 0.0
      %vm610 = vcmp.gt.f32.partialorder %v578, 0.0
      %vm611 = vcmp.gt.f32.partialorder %v579, 0.0
      %vm612 = vcmp.gt.f32.partialorder %v580, 0.0
      %vm613 = vcmp.gt.f32.partialorder %v581, 0.0
      %vm614 = vcmp.gt.f32.partialorder %v582, 0.0
      %vm615 = vcmp.gt.f32.partialorder %v583, 0.0
      %vm616 = vcmp.gt.f32.partialorder %v584, 0.0
      %vm617 = vcmp.gt.f32.partialorder %v585, 0.0
      %vm618 = vcmp.gt.f32.partialorder %v586, 0.0
      %vm619 = vcmp.gt.f32.partialorder %v587, 0.0
      %vm620 = vcmp.gt.f32.partialorder %v588, 0.0
      %vm621 = vcmp.gt.f32.partialorder %v589, 0.0
      %vm622 = vcmp.gt.f32.partialorder %v590, 0.0
      %vm623 = vcmp.gt.f32.partialorder %v591, 0.0
      %vm624 = vcmp.gt.f32.partialorder %v592, 0.0
      %vm625 = vcmp.gt.f32.partialorder %v593, 0.0
      %vm626 = vcmp.gt.f32.partialorder %v594, 0.0
      %vm627 = vcmp.gt.f32.partialorder %v595, 0.0
      %vm628 = vcmp.gt.f32.partialorder %v596, 0.0
      %vm629 = vcmp.gt.f32.partialorder %v597, 0.0
      %vm630 = vcmp.gt.f32.partialorder %v598, 0.0
      %vm631 = vcmp.gt.f32.partialorder %v599, 0.0
      %vm632 = vcmp.gt.f32.partialorder %v600, 0.0
      %vm633 = vcmp.gt.f32.partialorder %v601, 0.0
      %vm634 = vcmp.gt.f32.partialorder %v602, 0.0
      %vm635 = vcmp.gt.f32.partialorder %v603, 0.0
      %vm636 = vcmp.gt.f32.partialorder %v604, 0.0
      %s637 = scalar_lea.vmem %s474, %s505
      %v638 = vld [vmem:[%s637] sm:$0xff]
      %v639 = vld [vmem:[%s637 + $0x8] sm:$0xff]
      %v640 = vld [vmem:[%s637 + $0x10] sm:$0xff]
      %v641 = vld [vmem:[%s637 + $0x18] sm:$0xff]
      %v642 = vld [vmem:[%s637 + $0x20] sm:$0xff]
      %v643 = vld [vmem:[%s637 + $0x28] sm:$0xff]
      %v644 = vld [vmem:[%s637 + $0x30] sm:$0xff]
      %v645 = vld [vmem:[%s637 + $0x38] sm:$0xff]
      %v646 = vld [vmem:[%s637 + $0x40] sm:$0xff]
      %v647 = vld [vmem:[%s637 + $0x48] sm:$0xff]
      %v648 = vld [vmem:[%s637 + $0x50] sm:$0xff]
      %v649 = vld [vmem:[%s637 + $0x58] sm:$0xff]
      %v650 = vld [vmem:[%s637 + $0x60] sm:$0xff]
      %v651 = vld [vmem:[%s637 + $0x68] sm:$0xff]
      %v652 = vld [vmem:[%s637 + $0x70] sm:$0xff]
      %v653 = vld [vmem:[%s637 + $0x78] sm:$0xff]
      %v654 = vld [vmem:[%s637 + $0x80] sm:$0xff]
      %v655 = vld [vmem:[%s637 + $0x88] sm:$0xff]
      %v656 = vld [vmem:[%s637 + $0x90] sm:$0xff]
      %v657 = vld [vmem:[%s637 + $0x98] sm:$0xff]
      %v658 = vld [vmem:[%s637 + $0xa0] sm:$0xff]
      %v659 = vld [vmem:[%s637 + $0xa8] sm:$0xff]
      %v660 = vld [vmem:[%s637 + $0xb0] sm:$0xff]
      %v661 = vld [vmem:[%s637 + $0xb8] sm:$0xff]
      %v662 = vld [vmem:[%s637 + $0xc0] sm:$0xff]
      %v663 = vld [vmem:[%s637 + $0xc8] sm:$0xff]
      %v664 = vld [vmem:[%s637 + $0xd0] sm:$0xff]
      %v665 = vld [vmem:[%s637 + $0xd8] sm:$0xff]
      %v666 = vld [vmem:[%s637 + $0xe0] sm:$0xff]
      %v667 = vld [vmem:[%s637 + $0xe8] sm:$0xff]
      %v668 = vld [vmem:[%s637 + $0xf0] sm:$0xff]
      %v669 = vld [vmem:[%s637 + $0xf8] sm:$0xff]
      %vm670 = vcmp.gt.f32.partialorder %v638, 0.5
      %vm671 = vcmp.gt.f32.partialorder %v639, 0.5
      %vm672 = vcmp.gt.f32.partialorder %v640, 0.5
      %vm673 = vcmp.gt.f32.partialorder %v641, 0.5
      %vm674 = vcmp.gt.f32.partialorder %v642, 0.5
      %vm675 = vcmp.gt.f32.partialorder %v643, 0.5
      %vm676 = vcmp.gt.f32.partialorder %v644, 0.5
      %vm677 = vcmp.gt.f32.partialorder %v645, 0.5
      %vm678 = vcmp.gt.f32.partialorder %v646, 0.5
      %vm679 = vcmp.gt.f32.partialorder %v647, 0.5
      %vm680 = vcmp.gt.f32.partialorder %v648, 0.5
      %vm681 = vcmp.gt.f32.partialorder %v649, 0.5
      %vm682 = vcmp.gt.f32.partialorder %v650, 0.5
      %vm683 = vcmp.gt.f32.partialorder %v651, 0.5
      %vm684 = vcmp.gt.f32.partialorder %v652, 0.5
      %vm685 = vcmp.gt.f32.partialorder %v653, 0.5
      %vm686 = vcmp.gt.f32.partialorder %v654, 0.5
      %vm687 = vcmp.gt.f32.partialorder %v655, 0.5
      %vm688 = vcmp.gt.f32.partialorder %v656, 0.5
      %vm689 = vcmp.gt.f32.partialorder %v657, 0.5
      %vm690 = vcmp.gt.f32.partialorder %v658, 0.5
      %vm691 = vcmp.gt.f32.partialorder %v659, 0.5
      %vm692 = vcmp.gt.f32.partialorder %v660, 0.5
      %vm693 = vcmp.gt.f32.partialorder %v661, 0.5
      %vm694 = vcmp.gt.f32.partialorder %v662, 0.5
      %vm695 = vcmp.gt.f32.partialorder %v663, 0.5
      %vm696 = vcmp.gt.f32.partialorder %v664, 0.5
      %vm697 = vcmp.gt.f32.partialorder %v665, 0.5
      %vm698 = vcmp.gt.f32.partialorder %v666, 0.5
      %vm699 = vcmp.gt.f32.partialorder %v667, 0.5
      %vm700 = vcmp.gt.f32.partialorder %v668, 0.5
      %vm701 = vcmp.gt.f32.partialorder %v669, 0.5
      %v702 = vld [vmem:[%s478] sm:$0x3]
      %704 = vset.pattern.permute.xlu0 0
      %705 = vperm.xlu0 %704, %v507
      %v706 = vpop.permute.xlu0 %705
      %709 = vset.pattern.permute.xlu0 0
      %710 = vperm.xlu0 %709, %v508
      %v711 = vpop.permute.xlu0 %710
      %714 = vset.pattern.permute.xlu0 0
      %715 = vperm.xlu0 %714, %v509
      %v716 = vpop.permute.xlu0 %715
      %719 = vset.pattern.permute.xlu0 0
      %720 = vperm.xlu0 %719, %v510
      %v721 = vpop.permute.xlu0 %720
      %724 = vset.pattern.permute.xlu0 0
      %725 = vperm.xlu0 %724, %v511
      %v726 = vpop.permute.xlu0 %725
      %729 = vset.pattern.permute.xlu0 0
      %730 = vperm.xlu0 %729, %v512
      %v731 = vpop.permute.xlu0 %730
      %734 = vset.pattern.permute.xlu0 0
      %735 = vperm.xlu0 %734, %v513
      %v736 = vpop.permute.xlu0 %735
      %739 = vset.pattern.permute.xlu0 0
      %740 = vperm.xlu0 %739, %v514
      %v741 = vpop.permute.xlu0 %740
      %744 = vset.pattern.permute.xlu0 0
      %745 = vperm.xlu0 %744, %v515
      %v746 = vpop.permute.xlu0 %745
      %749 = vset.pattern.permute.xlu0 0
      %750 = vperm.xlu0 %749, %v516
      %v751 = vpop.permute.xlu0 %750
      %754 = vset.pattern.permute.xlu0 0
      %755 = vperm.xlu0 %754, %v517
      %v756 = vpop.permute.xlu0 %755
      %759 = vset.pattern.permute.xlu0 0
      %760 = vperm.xlu0 %759, %v518
      %v761 = vpop.permute.xlu0 %760
      %764 = vset.pattern.permute.xlu0 0
      %765 = vperm.xlu0 %764, %v519
      %v766 = vpop.permute.xlu0 %765
      %769 = vset.pattern.permute.xlu0 0
      %770 = vperm.xlu0 %769, %v520
      %v771 = vpop.permute.xlu0 %770
      %774 = vset.pattern.permute.xlu0 0
      %775 = vperm.xlu0 %774, %v521
      %v776 = vpop.permute.xlu0 %775
      %779 = vset.pattern.permute.xlu0 0
      %780 = vperm.xlu0 %779, %v522
      %v781 = vpop.permute.xlu0 %780
      %784 = vset.pattern.permute.xlu0 0
      %785 = vperm.xlu0 %784, %v523
      %v786 = vpop.permute.xlu0 %785
      %789 = vset.pattern.permute.xlu0 0
      %790 = vperm.xlu0 %789, %v524
      %v791 = vpop.permute.xlu0 %790
      %794 = vset.pattern.permute.xlu0 0
      %795 = vperm.xlu0 %794, %v525
      %v796 = vpop.permute.xlu0 %795
      %799 = vset.pattern.permute.xlu0 0
      %800 = vperm.xlu0 %799, %v526
      %v801 = vpop.permute.xlu0 %800
      %804 = vset.pattern.permute.xlu0 0
      %805 = vperm.xlu0 %804, %v527
      %v806 = vpop.permute.xlu0 %805
      %809 = vset.pattern.permute.xlu0 0
      %810 = vperm.xlu0 %809, %v528
      %v811 = vpop.permute.xlu0 %810
      %814 = vset.pattern.permute.xlu0 0
      %815 = vperm.xlu0 %814, %v529
      %v816 = vpop.permute.xlu0 %815
      %819 = vset.pattern.permute.xlu0 0
      %820 = vperm.xlu0 %819, %v530
      %v821 = vpop.permute.xlu0 %820
      %824 = vset.pattern.permute.xlu0 0
      %825 = vperm.xlu0 %824, %v531
      %v826 = vpop.permute.xlu0 %825
      %829 = vset.pattern.permute.xlu0 0
      %830 = vperm.xlu0 %829, %v532
      %v831 = vpop.permute.xlu0 %830
      %834 = vset.pattern.permute.xlu0 0
      %835 = vperm.xlu0 %834, %v533
      %v836 = vpop.permute.xlu0 %835
      %839 = vset.pattern.permute.xlu0 0
      %840 = vperm.xlu0 %839, %v534
      %v841 = vpop.permute.xlu0 %840
      %844 = vset.pattern.permute.xlu0 0
      %845 = vperm.xlu0 %844, %v535
      %v846 = vpop.permute.xlu0 %845
      %849 = vset.pattern.permute.xlu0 0
      %850 = vperm.xlu0 %849, %v536
      %v851 = vpop.permute.xlu0 %850
      %854 = vset.pattern.permute.xlu0 0
      %855 = vperm.xlu0 %854, %v537
      %v856 = vpop.permute.xlu0 %855
      %859 = vset.pattern.permute.xlu0 0
      %860 = vperm.xlu0 %859, %v538
      %v861 = vpop.permute.xlu0 %860
      %v864 = vperm.slane %v702, 0
      %v865 = vperm.slane %v702, 1
      %v868 = vsub.f32 %v706, %v864
      %v869 = vsub.f32 %v706, %v865
      %v870 = vsub.f32 %v711, %v864
      %v871 = vsub.f32 %v711, %v865
      %v872 = vsub.f32 %v716, %v864
      %v873 = vsub.f32 %v716, %v865
      %v874 = vsub.f32 %v721, %v864
      %v875 = vsub.f32 %v721, %v865
      %v876 = vsub.f32 %v726, %v864
      %v877 = vsub.f32 %v726, %v865
      %v878 = vsub.f32 %v731, %v864
      %v879 = vsub.f32 %v731, %v865
      %v880 = vsub.f32 %v736, %v864
      %v881 = vsub.f32 %v736, %v865
      %v882 = vsub.f32 %v741, %v864
      %v883 = vsub.f32 %v741, %v865
      %v884 = vsub.f32 %v746, %v864
      %v885 = vsub.f32 %v746, %v865
      %v886 = vsub.f32 %v751, %v864
      %v887 = vsub.f32 %v751, %v865
      %v888 = vsub.f32 %v756, %v864
      %v889 = vsub.f32 %v756, %v865
      %v890 = vsub.f32 %v761, %v864
      %v891 = vsub.f32 %v761, %v865
      %v892 = vsub.f32 %v766, %v864
      %v893 = vsub.f32 %v766, %v865
      %v894 = vsub.f32 %v771, %v864
      %v895 = vsub.f32 %v771, %v865
      %v896 = vsub.f32 %v776, %v864
      %v897 = vsub.f32 %v776, %v865
      %v898 = vsub.f32 %v781, %v864
      %v899 = vsub.f32 %v781, %v865
      %v900 = vsub.f32 %v786, %v864
      %v901 = vsub.f32 %v786, %v865
      %v902 = vsub.f32 %v791, %v864
      %v903 = vsub.f32 %v791, %v865
      %v904 = vsub.f32 %v796, %v864
      %v905 = vsub.f32 %v796, %v865
      %v906 = vsub.f32 %v801, %v864
      %v907 = vsub.f32 %v801, %v865
      %v908 = vsub.f32 %v806, %v864
      %v909 = vsub.f32 %v806, %v865
      %v910 = vsub.f32 %v811, %v864
      %v911 = vsub.f32 %v811, %v865
      %v912 = vsub.f32 %v816, %v864
      %v913 = vsub.f32 %v816, %v865
      %v914 = vsub.f32 %v821, %v864
      %v915 = vsub.f32 %v821, %v865
      %v916 = vsub.f32 %v826, %v864
      %v917 = vsub.f32 %v826, %v865
      %v918 = vsub.f32 %v831, %v864
      %v919 = vsub.f32 %v831, %v865
      %v920 = vsub.f32 %v836, %v864
      %v921 = vsub.f32 %v836, %v865
      %v922 = vsub.f32 %v841, %v864
      %v923 = vsub.f32 %v841, %v865
      %v924 = vsub.f32 %v846, %v864
      %v925 = vsub.f32 %v846, %v865
      %v926 = vsub.f32 %v851, %v864
      %v927 = vsub.f32 %v851, %v865
      %v928 = vsub.f32 %v856, %v864
      %v929 = vsub.f32 %v856, %v865
      %v930 = vsub.f32 %v861, %v864
      %v931 = vsub.f32 %v861, %v865
      %v932 = vld [vmem:[%s483] sm:$0x3]
      %934 = vset.pattern.permute.xlu0 0
      %935 = vperm.xlu0 %934, %v540
      %v936 = vpop.permute.xlu0 %935
      %939 = vset.pattern.permute.xlu0 0
      %940 = vperm.xlu0 %939, %v541
      %v941 = vpop.permute.xlu0 %940
      %944 = vset.pattern.permute.xlu0 0
      %945 = vperm.xlu0 %944, %v542
      %v946 = vpop.permute.xlu0 %945
      %949 = vset.pattern.permute.xlu0 0
      %950 = vperm.xlu0 %949, %v543
      %v951 = vpop.permute.xlu0 %950
      %954 = vset.pattern.permute.xlu0 0
      %955 = vperm.xlu0 %954, %v544
      %v956 = vpop.permute.xlu0 %955
      %959 = vset.pattern.permute.xlu0 0
      %960 = vperm.xlu0 %959, %v545
      %v961 = vpop.permute.xlu0 %960
      %964 = vset.pattern.permute.xlu0 0
      %965 = vperm.xlu0 %964, %v546
      %v966 = vpop.permute.xlu0 %965
      %969 = vset.pattern.permute.xlu0 0
      %970 = vperm.xlu0 %969, %v547
      %v971 = vpop.permute.xlu0 %970
      %974 = vset.pattern.permute.xlu0 0
      %975 = vperm.xlu0 %974, %v548
      %v976 = vpop.permute.xlu0 %975
      %979 = vset.pattern.permute.xlu0 0
      %980 = vperm.xlu0 %979, %v549
      %v981 = vpop.permute.xlu0 %980
      %984 = vset.pattern.permute.xlu0 0
      %985 = vperm.xlu0 %984, %v550
      %v986 = vpop.permute.xlu0 %985
      %989 = vset.pattern.permute.xlu0 0
      %990 = vperm.xlu0 %989, %v551
      %v991 = vpop.permute.xlu0 %990
      %994 = vset.pattern.permute.xlu0 0
      %995 = vperm.xlu0 %994, %v552
      %v996 = vpop.permute.xlu0 %995
      %999 = vset.pattern.permute.xlu0 0
      %1000 = vperm.xlu0 %999, %v553
      %v1001 = vpop.permute.xlu0 %1000
      %1004 = vset.pattern.permute.xlu0 0
      %1005 = vperm.xlu0 %1004, %v554
      %v1006 = vpop.permute.xlu0 %1005
      %1009 = vset.pattern.permute.xlu0 0
      %1010 = vperm.xlu0 %1009, %v555
      %v1011 = vpop.permute.xlu0 %1010
      %1014 = vset.pattern.permute.xlu0 0
      %1015 = vperm.xlu0 %1014, %v556
      %v1016 = vpop.permute.xlu0 %1015
      %1019 = vset.pattern.permute.xlu0 0
      %1020 = vperm.xlu0 %1019, %v557
      %v1021 = vpop.permute.xlu0 %1020
      %1024 = vset.pattern.permute.xlu0 0
      %1025 = vperm.xlu0 %1024, %v558
      %v1026 = vpop.permute.xlu0 %1025
      %1029 = vset.pattern.permute.xlu0 0
      %1030 = vperm.xlu0 %1029, %v559
      %v1031 = vpop.permute.xlu0 %1030
      %1034 = vset.pattern.permute.xlu0 0
      %1035 = vperm.xlu0 %1034, %v560
      %v1036 = vpop.permute.xlu0 %1035
      %1039 = vset.pattern.permute.xlu0 0
      %1040 = vperm.xlu0 %1039, %v561
      %v1041 = vpop.permute.xlu0 %1040
      %1044 = vset.pattern.permute.xlu0 0
      %1045 = vperm.xlu0 %1044, %v562
      %v1046 = vpop.permute.xlu0 %1045
      %1049 = vset.pattern.permute.xlu0 0
      %1050 = vperm.xlu0 %1049, %v563
      %v1051 = vpop.permute.xlu0 %1050
      %1054 = vset.pattern.permute.xlu0 0
      %1055 = vperm.xlu0 %1054, %v564
      %v1056 = vpop.permute.xlu0 %1055
      %1059 = vset.pattern.permute.xlu0 0
      %1060 = vperm.xlu0 %1059, %v565
      %v1061 = vpop.permute.xlu0 %1060
      %1064 = vset.pattern.permute.xlu0 0
      %1065 = vperm.xlu0 %1064, %v566
      %v1066 = vpop.permute.xlu0 %1065
      %1069 = vset.pattern.permute.xlu0 0
      %1070 = vperm.xlu0 %1069, %v567
      %v1071 = vpop.permute.xlu0 %1070
      %1074 = vset.pattern.permute.xlu0 0
      %1075 = vperm.xlu0 %1074, %v568
      %v1076 = vpop.permute.xlu0 %1075
      %1079 = vset.pattern.permute.xlu0 0
      %1080 = vperm.xlu0 %1079, %v569
      %v1081 = vpop.permute.xlu0 %1080
      %1084 = vset.pattern.permute.xlu0 0
      %1085 = vperm.xlu0 %1084, %v570
      %v1086 = vpop.permute.xlu0 %1085
      %1089 = vset.pattern.permute.xlu0 0
      %1090 = vperm.xlu0 %1089, %v571
      %v1091 = vpop.permute.xlu0 %1090
      %v1094 = vperm.slane %v932, 0
      %v1095 = vperm.slane %v932, 1
      %v1098 = vsub.f32 %v936, %v1094
      %v1099 = vsub.f32 %v936, %v1095
      %v1100 = vsub.f32 %v941, %v1094
      %v1101 = vsub.f32 %v941, %v1095
      %v1102 = vsub.f32 %v946, %v1094
      %v1103 = vsub.f32 %v946, %v1095
      %v1104 = vsub.f32 %v951, %v1094
      %v1105 = vsub.f32 %v951, %v1095
      %v1106 = vsub.f32 %v956, %v1094
      %v1107 = vsub.f32 %v956, %v1095
      %v1108 = vsub.f32 %v961, %v1094
      %v1109 = vsub.f32 %v961, %v1095
      %v1110 = vsub.f32 %v966, %v1094
      %v1111 = vsub.f32 %v966, %v1095
      %v1112 = vsub.f32 %v971, %v1094
      %v1113 = vsub.f32 %v971, %v1095
      %v1114 = vsub.f32 %v976, %v1094
      %v1115 = vsub.f32 %v976, %v1095
      %v1116 = vsub.f32 %v981, %v1094
      %v1117 = vsub.f32 %v981, %v1095
      %v1118 = vsub.f32 %v986, %v1094
      %v1119 = vsub.f32 %v986, %v1095
      %v1120 = vsub.f32 %v991, %v1094
      %v1121 = vsub.f32 %v991, %v1095
      %v1122 = vsub.f32 %v996, %v1094
      %v1123 = vsub.f32 %v996, %v1095
      %v1124 = vsub.f32 %v1001, %v1094
      %v1125 = vsub.f32 %v1001, %v1095
      %v1126 = vsub.f32 %v1006, %v1094
      %v1127 = vsub.f32 %v1006, %v1095
      %v1128 = vsub.f32 %v1011, %v1094
      %v1129 = vsub.f32 %v1011, %v1095
      %v1130 = vsub.f32 %v1016, %v1094
      %v1131 = vsub.f32 %v1016, %v1095
      %v1132 = vsub.f32 %v1021, %v1094
      %v1133 = vsub.f32 %v1021, %v1095
      %v1134 = vsub.f32 %v1026, %v1094
      %v1135 = vsub.f32 %v1026, %v1095
      %v1136 = vsub.f32 %v1031, %v1094
      %v1137 = vsub.f32 %v1031, %v1095
      %v1138 = vsub.f32 %v1036, %v1094
      %v1139 = vsub.f32 %v1036, %v1095
      %v1140 = vsub.f32 %v1041, %v1094
      %v1141 = vsub.f32 %v1041, %v1095
      %v1142 = vsub.f32 %v1046, %v1094
      %v1143 = vsub.f32 %v1046, %v1095
      %v1144 = vsub.f32 %v1051, %v1094
      %v1145 = vsub.f32 %v1051, %v1095
      %v1146 = vsub.f32 %v1056, %v1094
      %v1147 = vsub.f32 %v1056, %v1095
      %v1148 = vsub.f32 %v1061, %v1094
      %v1149 = vsub.f32 %v1061, %v1095
      %v1150 = vsub.f32 %v1066, %v1094
      %v1151 = vsub.f32 %v1066, %v1095
      %v1152 = vsub.f32 %v1071, %v1094
      %v1153 = vsub.f32 %v1071, %v1095
      %v1154 = vsub.f32 %v1076, %v1094
      %v1155 = vsub.f32 %v1076, %v1095
      %v1156 = vsub.f32 %v1081, %v1094
      %v1157 = vsub.f32 %v1081, %v1095
      %v1158 = vsub.f32 %v1086, %v1094
      %v1159 = vsub.f32 %v1086, %v1095
      %v1160 = vsub.f32 %v1091, %v1094
      %v1161 = vsub.f32 %v1091, %v1095
      %v1162 = vmul.f32 %v868, %v868
      %v1163 = vmul.f32 %v869, %v869
      %v1164 = vmul.f32 %v870, %v870
      %v1165 = vmul.f32 %v871, %v871
      %v1166 = vmul.f32 %v872, %v872
      %v1167 = vmul.f32 %v873, %v873
      %v1168 = vmul.f32 %v874, %v874
      %v1169 = vmul.f32 %v875, %v875
      %v1170 = vmul.f32 %v876, %v876
      %v1171 = vmul.f32 %v877, %v877
      %v1172 = vmul.f32 %v878, %v878
      %v1173 = vmul.f32 %v879, %v879
      %v1174 = vmul.f32 %v880, %v880
      %v1175 = vmul.f32 %v881, %v881
      %v1176 = vmul.f32 %v882, %v882
      %v1177 = vmul.f32 %v883, %v883
      %v1178 = vmul.f32 %v884, %v884
      %v1179 = vmul.f32 %v885, %v885
      %v1180 = vmul.f32 %v886, %v886
      %v1181 = vmul.f32 %v887, %v887
      %v1182 = vmul.f32 %v888, %v888
      %v1183 = vmul.f32 %v889, %v889
      %v1184 = vmul.f32 %v890, %v890
      %v1185 = vmul.f32 %v891, %v891
      %v1186 = vmul.f32 %v892, %v892
      %v1187 = vmul.f32 %v893, %v893
      %v1188 = vmul.f32 %v894, %v894
      %v1189 = vmul.f32 %v895, %v895
      %v1190 = vmul.f32 %v896, %v896
      %v1191 = vmul.f32 %v897, %v897
      %v1192 = vmul.f32 %v898, %v898
      %v1193 = vmul.f32 %v899, %v899
      %v1194 = vmul.f32 %v900, %v900
      %v1195 = vmul.f32 %v901, %v901
      %v1196 = vmul.f32 %v902, %v902
      %v1197 = vmul.f32 %v903, %v903
      %v1198 = vmul.f32 %v904, %v904
      %v1199 = vmul.f32 %v905, %v905
      %v1200 = vmul.f32 %v906, %v906
      %v1201 = vmul.f32 %v907, %v907
      %v1202 = vmul.f32 %v908, %v908
      %v1203 = vmul.f32 %v909, %v909
      %v1204 = vmul.f32 %v910, %v910
      %v1205 = vmul.f32 %v911, %v911
      %v1206 = vmul.f32 %v912, %v912
      %v1207 = vmul.f32 %v913, %v913
      %v1208 = vmul.f32 %v914, %v914
      %v1209 = vmul.f32 %v915, %v915
      %v1210 = vmul.f32 %v916, %v916
      %v1211 = vmul.f32 %v917, %v917
      %v1212 = vmul.f32 %v918, %v918
      %v1213 = vmul.f32 %v919, %v919
      %v1214 = vmul.f32 %v920, %v920
      %v1215 = vmul.f32 %v921, %v921
      %v1216 = vmul.f32 %v922, %v922
      %v1217 = vmul.f32 %v923, %v923
      %v1218 = vmul.f32 %v924, %v924
      %v1219 = vmul.f32 %v925, %v925
      %v1220 = vmul.f32 %v926, %v926
      %v1221 = vmul.f32 %v927, %v927
      %v1222 = vmul.f32 %v928, %v928
      %v1223 = vmul.f32 %v929, %v929
      %v1224 = vmul.f32 %v930, %v930
      %v1225 = vmul.f32 %v931, %v931
      %v1226 = vmul.f32 %v1098, %v1098
      %v1227 = vmul.f32 %v1099, %v1099
      %v1228 = vmul.f32 %v1100, %v1100
      %v1229 = vmul.f32 %v1101, %v1101
      %v1230 = vmul.f32 %v1102, %v1102
      %v1231 = vmul.f32 %v1103, %v1103
      %v1232 = vmul.f32 %v1104, %v1104
      %v1233 = vmul.f32 %v1105, %v1105
      %v1234 = vmul.f32 %v1106, %v1106
      %v1235 = vmul.f32 %v1107, %v1107
      %v1236 = vmul.f32 %v1108, %v1108
      %v1237 = vmul.f32 %v1109, %v1109
      %v1238 = vmul.f32 %v1110, %v1110
      %v1239 = vmul.f32 %v1111, %v1111
      %v1240 = vmul.f32 %v1112, %v1112
      %v1241 = vmul.f32 %v1113, %v1113
      %v1242 = vmul.f32 %v1114, %v1114
      %v1243 = vmul.f32 %v1115, %v1115
      %v1244 = vmul.f32 %v1116, %v1116
      %v1245 = vmul.f32 %v1117, %v1117
      %v1246 = vmul.f32 %v1118, %v1118
      %v1247 = vmul.f32 %v1119, %v1119
      %v1248 = vmul.f32 %v1120, %v1120
      %v1249 = vmul.f32 %v1121, %v1121
      %v1250 = vmul.f32 %v1122, %v1122
      %v1251 = vmul.f32 %v1123, %v1123
      %v1252 = vmul.f32 %v1124, %v1124
      %v1253 = vmul.f32 %v1125, %v1125
      %v1254 = vmul.f32 %v1126, %v1126
      %v1255 = vmul.f32 %v1127, %v1127
      %v1256 = vmul.f32 %v1128, %v1128
      %v1257 = vmul.f32 %v1129, %v1129
      %v1258 = vmul.f32 %v1130, %v1130
      %v1259 = vmul.f32 %v1131, %v1131
      %v1260 = vmul.f32 %v1132, %v1132
      %v1261 = vmul.f32 %v1133, %v1133
      %v1262 = vmul.f32 %v1134, %v1134
      %v1263 = vmul.f32 %v1135, %v1135
      %v1264 = vmul.f32 %v1136, %v1136
      %v1265 = vmul.f32 %v1137, %v1137
      %v1266 = vmul.f32 %v1138, %v1138
      %v1267 = vmul.f32 %v1139, %v1139
      %v1268 = vmul.f32 %v1140, %v1140
      %v1269 = vmul.f32 %v1141, %v1141
      %v1270 = vmul.f32 %v1142, %v1142
      %v1271 = vmul.f32 %v1143, %v1143
      %v1272 = vmul.f32 %v1144, %v1144
      %v1273 = vmul.f32 %v1145, %v1145
      %v1274 = vmul.f32 %v1146, %v1146
      %v1275 = vmul.f32 %v1147, %v1147
      %v1276 = vmul.f32 %v1148, %v1148
      %v1277 = vmul.f32 %v1149, %v1149
      %v1278 = vmul.f32 %v1150, %v1150
      %v1279 = vmul.f32 %v1151, %v1151
      %v1280 = vmul.f32 %v1152, %v1152
      %v1281 = vmul.f32 %v1153, %v1153
      %v1282 = vmul.f32 %v1154, %v1154
      %v1283 = vmul.f32 %v1155, %v1155
      %v1284 = vmul.f32 %v1156, %v1156
      %v1285 = vmul.f32 %v1157, %v1157
      %v1286 = vmul.f32 %v1158, %v1158
      %v1287 = vmul.f32 %v1159, %v1159
      %v1288 = vmul.f32 %v1160, %v1160
      %v1289 = vmul.f32 %v1161, %v1161
      %v1290 = vadd.f32 %v1162, %v1226
      %v1291 = vadd.f32 %v1163, %v1227
      %v1292 = vadd.f32 %v1164, %v1228
      %v1293 = vadd.f32 %v1165, %v1229
      %v1294 = vadd.f32 %v1166, %v1230
      %v1295 = vadd.f32 %v1167, %v1231
      %v1296 = vadd.f32 %v1168, %v1232
      %v1297 = vadd.f32 %v1169, %v1233
      %v1298 = vadd.f32 %v1170, %v1234
      %v1299 = vadd.f32 %v1171, %v1235
      %v1300 = vadd.f32 %v1172, %v1236
      %v1301 = vadd.f32 %v1173, %v1237
      %v1302 = vadd.f32 %v1174, %v1238
      %v1303 = vadd.f32 %v1175, %v1239
      %v1304 = vadd.f32 %v1176, %v1240
      %v1305 = vadd.f32 %v1177, %v1241
      %v1306 = vadd.f32 %v1178, %v1242
      %v1307 = vadd.f32 %v1179, %v1243
      %v1308 = vadd.f32 %v1180, %v1244
      %v1309 = vadd.f32 %v1181, %v1245
      %v1310 = vadd.f32 %v1182, %v1246
      %v1311 = vadd.f32 %v1183, %v1247
      %v1312 = vadd.f32 %v1184, %v1248
      %v1313 = vadd.f32 %v1185, %v1249
      %v1314 = vadd.f32 %v1186, %v1250
      %v1315 = vadd.f32 %v1187, %v1251
      %v1316 = vadd.f32 %v1188, %v1252
      %v1317 = vadd.f32 %v1189, %v1253
      %v1318 = vadd.f32 %v1190, %v1254
      %v1319 = vadd.f32 %v1191, %v1255
      %v1320 = vadd.f32 %v1192, %v1256
      %v1321 = vadd.f32 %v1193, %v1257
      %v1322 = vadd.f32 %v1194, %v1258
      %v1323 = vadd.f32 %v1195, %v1259
      %v1324 = vadd.f32 %v1196, %v1260
      %v1325 = vadd.f32 %v1197, %v1261
      %v1326 = vadd.f32 %v1198, %v1262
      %v1327 = vadd.f32 %v1199, %v1263
      %v1328 = vadd.f32 %v1200, %v1264
      %v1329 = vadd.f32 %v1201, %v1265
      %v1330 = vadd.f32 %v1202, %v1266
      %v1331 = vadd.f32 %v1203, %v1267
      %v1332 = vadd.f32 %v1204, %v1268
      %v1333 = vadd.f32 %v1205, %v1269
      %v1334 = vadd.f32 %v1206, %v1270
      %v1335 = vadd.f32 %v1207, %v1271
      %v1336 = vadd.f32 %v1208, %v1272
      %v1337 = vadd.f32 %v1209, %v1273
      %v1338 = vadd.f32 %v1210, %v1274
      %v1339 = vadd.f32 %v1211, %v1275
      %v1340 = vadd.f32 %v1212, %v1276
      %v1341 = vadd.f32 %v1213, %v1277
      %v1342 = vadd.f32 %v1214, %v1278
      %v1343 = vadd.f32 %v1215, %v1279
      %v1344 = vadd.f32 %v1216, %v1280
      %v1345 = vadd.f32 %v1217, %v1281
      %v1346 = vadd.f32 %v1218, %v1282
      %v1347 = vadd.f32 %v1219, %v1283
      %v1348 = vadd.f32 %v1220, %v1284
      %v1349 = vadd.f32 %v1221, %v1285
      %v1350 = vadd.f32 %v1222, %v1286
      %v1351 = vadd.f32 %v1223, %v1287
      %v1352 = vadd.f32 %v1224, %v1288
      %v1353 = vadd.f32 %v1225, %v1289
      %v1354 = vld [vmem:[%s454] sm:$0x3]
      %vm1355 = vcmp.gt.f32.partialorder %v1354, 0.0
      %v1356 = vld [vmem:[%s463] sm:$0x3]
      %vm1357 = vcmp.gt.f32.partialorder %v1356, 0.5
      %v1358 = vsel %vm605, 1, 0
      %v1359 = vsel %vm606, 1, 0
      %v1360 = vsel %vm607, 1, 0
      %v1361 = vsel %vm608, 1, 0
      %v1362 = vsel %vm609, 1, 0
      %v1363 = vsel %vm610, 1, 0
      %v1364 = vsel %vm611, 1, 0
      %v1365 = vsel %vm612, 1, 0
      %v1366 = vsel %vm613, 1, 0
      %v1367 = vsel %vm614, 1, 0
      %v1368 = vsel %vm615, 1, 0
      %v1369 = vsel %vm616, 1, 0
      %v1370 = vsel %vm617, 1, 0
      %v1371 = vsel %vm618, 1, 0
      %v1372 = vsel %vm619, 1, 0
      %v1373 = vsel %vm620, 1, 0
      %v1374 = vsel %vm621, 1, 0
      %v1375 = vsel %vm622, 1, 0
      %v1376 = vsel %vm623, 1, 0
      %v1377 = vsel %vm624, 1, 0
      %v1378 = vsel %vm625, 1, 0
      %v1379 = vsel %vm626, 1, 0
      %v1380 = vsel %vm627, 1, 0
      %v1381 = vsel %vm628, 1, 0
      %v1382 = vsel %vm629, 1, 0
      %v1383 = vsel %vm630, 1, 0
      %v1384 = vsel %vm631, 1, 0
      %v1385 = vsel %vm632, 1, 0
      %v1386 = vsel %vm633, 1, 0
      %v1387 = vsel %vm634, 1, 0
      %v1388 = vsel %vm635, 1, 0
      %v1389 = vsel %vm636, 1, 0
      %1390 = vset.pattern.permute.xlu0 0
      %1391 = vperm.xlu0 %1390, %v1358
      %v1392 = vpop.permute.xlu0 %1391
      %1393 = vset.pattern.permute.xlu0 0
      %1394 = vperm.xlu0 %1393, %v1359
      %v1395 = vpop.permute.xlu0 %1394
      %1396 = vset.pattern.permute.xlu0 0
      %1397 = vperm.xlu0 %1396, %v1360
      %v1398 = vpop.permute.xlu0 %1397
      %1399 = vset.pattern.permute.xlu0 0
      %1400 = vperm.xlu0 %1399, %v1361
      %v1401 = vpop.permute.xlu0 %1400
      %1402 = vset.pattern.permute.xlu0 0
      %1403 = vperm.xlu0 %1402, %v1362
      %v1404 = vpop.permute.xlu0 %1403
      %1405 = vset.pattern.permute.xlu0 0
      %1406 = vperm.xlu0 %1405, %v1363
      %v1407 = vpop.permute.xlu0 %1406
      %1408 = vset.pattern.permute.xlu0 0
      %1409 = vperm.xlu0 %1408, %v1364
      %v1410 = vpop.permute.xlu0 %1409
      %1411 = vset.pattern.permute.xlu0 0
      %1412 = vperm.xlu0 %1411, %v1365
      %v1413 = vpop.permute.xlu0 %1412
      %1414 = vset.pattern.permute.xlu0 0
      %1415 = vperm.xlu0 %1414, %v1366
      %v1416 = vpop.permute.xlu0 %1415
      %1417 = vset.pattern.permute.xlu0 0
      %1418 = vperm.xlu0 %1417, %v1367
      %v1419 = vpop.permute.xlu0 %1418
      %1420 = vset.pattern.permute.xlu0 0
      %1421 = vperm.xlu0 %1420, %v1368
      %v1422 = vpop.permute.xlu0 %1421
      %1423 = vset.pattern.permute.xlu0 0
      %1424 = vperm.xlu0 %1423, %v1369
      %v1425 = vpop.permute.xlu0 %1424
      %1426 = vset.pattern.permute.xlu0 0
      %1427 = vperm.xlu0 %1426, %v1370
      %v1428 = vpop.permute.xlu0 %1427
      %1429 = vset.pattern.permute.xlu0 0
      %1430 = vperm.xlu0 %1429, %v1371
      %v1431 = vpop.permute.xlu0 %1430
      %1432 = vset.pattern.permute.xlu0 0
      %1433 = vperm.xlu0 %1432, %v1372
      %v1434 = vpop.permute.xlu0 %1433
      %1435 = vset.pattern.permute.xlu0 0
      %1436 = vperm.xlu0 %1435, %v1373
      %v1437 = vpop.permute.xlu0 %1436
      %1438 = vset.pattern.permute.xlu0 0
      %1439 = vperm.xlu0 %1438, %v1374
      %v1440 = vpop.permute.xlu0 %1439
      %1441 = vset.pattern.permute.xlu0 0
      %1442 = vperm.xlu0 %1441, %v1375
      %v1443 = vpop.permute.xlu0 %1442
      %1444 = vset.pattern.permute.xlu0 0
      %1445 = vperm.xlu0 %1444, %v1376
      %v1446 = vpop.permute.xlu0 %1445
      %1447 = vset.pattern.permute.xlu0 0
      %1448 = vperm.xlu0 %1447, %v1377
      %v1449 = vpop.permute.xlu0 %1448
      %1450 = vset.pattern.permute.xlu0 0
      %1451 = vperm.xlu0 %1450, %v1378
      %v1452 = vpop.permute.xlu0 %1451
      %1453 = vset.pattern.permute.xlu0 0
      %1454 = vperm.xlu0 %1453, %v1379
      %v1455 = vpop.permute.xlu0 %1454
      %1456 = vset.pattern.permute.xlu0 0
      %1457 = vperm.xlu0 %1456, %v1380
      %v1458 = vpop.permute.xlu0 %1457
      %1459 = vset.pattern.permute.xlu0 0
      %1460 = vperm.xlu0 %1459, %v1381
      %v1461 = vpop.permute.xlu0 %1460
      %1462 = vset.pattern.permute.xlu0 0
      %1463 = vperm.xlu0 %1462, %v1382
      %v1464 = vpop.permute.xlu0 %1463
      %1465 = vset.pattern.permute.xlu0 0
      %1466 = vperm.xlu0 %1465, %v1383
      %v1467 = vpop.permute.xlu0 %1466
      %1468 = vset.pattern.permute.xlu0 0
      %1469 = vperm.xlu0 %1468, %v1384
      %v1470 = vpop.permute.xlu0 %1469
      %1471 = vset.pattern.permute.xlu0 0
      %1472 = vperm.xlu0 %1471, %v1385
      %v1473 = vpop.permute.xlu0 %1472
      %1474 = vset.pattern.permute.xlu0 0
      %1475 = vperm.xlu0 %1474, %v1386
      %v1476 = vpop.permute.xlu0 %1475
      %1477 = vset.pattern.permute.xlu0 0
      %1478 = vperm.xlu0 %1477, %v1387
      %v1479 = vpop.permute.xlu0 %1478
      %1480 = vset.pattern.permute.xlu0 0
      %1481 = vperm.xlu0 %1480, %v1388
      %v1482 = vpop.permute.xlu0 %1481
      %1483 = vset.pattern.permute.xlu0 0
      %1484 = vperm.xlu0 %1483, %v1389
      %v1485 = vpop.permute.xlu0 %1484
      %vm1486 = vcmp.eq.s32.totalorder %v1392, 1
      %vm1487 = vcmp.eq.s32.totalorder %v1395, 1
      %vm1488 = vcmp.eq.s32.totalorder %v1398, 1
      %vm1489 = vcmp.eq.s32.totalorder %v1401, 1
      %vm1490 = vcmp.eq.s32.totalorder %v1404, 1
      %vm1491 = vcmp.eq.s32.totalorder %v1407, 1
      %vm1492 = vcmp.eq.s32.totalorder %v1410, 1
      %vm1493 = vcmp.eq.s32.totalorder %v1413, 1
      %vm1494 = vcmp.eq.s32.totalorder %v1416, 1
      %vm1495 = vcmp.eq.s32.totalorder %v1419, 1
      %vm1496 = vcmp.eq.s32.totalorder %v1422, 1
      %vm1497 = vcmp.eq.s32.totalorder %v1425, 1
      %vm1498 = vcmp.eq.s32.totalorder %v1428, 1
      %vm1499 = vcmp.eq.s32.totalorder %v1431, 1
      %vm1500 = vcmp.eq.s32.totalorder %v1434, 1
      %vm1501 = vcmp.eq.s32.totalorder %v1437, 1
      %vm1502 = vcmp.eq.s32.totalorder %v1440, 1
      %vm1503 = vcmp.eq.s32.totalorder %v1443, 1
      %vm1504 = vcmp.eq.s32.totalorder %v1446, 1
      %vm1505 = vcmp.eq.s32.totalorder %v1449, 1
      %vm1506 = vcmp.eq.s32.totalorder %v1452, 1
      %vm1507 = vcmp.eq.s32.totalorder %v1455, 1
      %vm1508 = vcmp.eq.s32.totalorder %v1458, 1
      %vm1509 = vcmp.eq.s32.totalorder %v1461, 1
      %vm1510 = vcmp.eq.s32.totalorder %v1464, 1
      %vm1511 = vcmp.eq.s32.totalorder %v1467, 1
      %vm1512 = vcmp.eq.s32.totalorder %v1470, 1
      %vm1513 = vcmp.eq.s32.totalorder %v1473, 1
      %vm1514 = vcmp.eq.s32.totalorder %v1476, 1
      %vm1515 = vcmp.eq.s32.totalorder %v1479, 1
      %vm1516 = vcmp.eq.s32.totalorder %v1482, 1
      %vm1517 = vcmp.eq.s32.totalorder %v1485, 1
      %v1518 = vsel %vm1355, 1, 0
      %v1519 = vperm.slane %v1518, 0
      %v1520 = vperm.slane %v1518, 1
      %vm1521 = vcmp.eq.s32.totalorder %v1519, 1
      %vm1522 = vcmp.eq.s32.totalorder %v1520, 1
      %vm1523 = vmxor %vm1486, %vm1521
      %vm1524 = vmxor %vm1486, %vm1522
      %vm1525 = vmxor %vm1487, %vm1521
      %vm1526 = vmxor %vm1487, %vm1522
      %vm1527 = vmxor %vm1488, %vm1521
      %vm1528 = vmxor %vm1488, %vm1522
      %vm1529 = vmxor %vm1489, %vm1521
      %vm1530 = vmxor %vm1489, %vm1522
      %vm1531 = vmxor %vm1490, %vm1521
      %vm1532 = vmxor %vm1490, %vm1522
      %vm1533 = vmxor %vm1491, %vm1521
      %vm1534 = vmxor %vm1491, %vm1522
      %vm1535 = vmxor %vm1492, %vm1521
      %vm1536 = vmxor %vm1492, %vm1522
      %vm1537 = vmxor %vm1493, %vm1521
      %vm1538 = vmxor %vm1493, %vm1522
      %vm1539 = vmxor %vm1494, %vm1521
      %vm1540 = vmxor %vm1494, %vm1522
      %vm1541 = vmxor %vm1495, %vm1521
      %vm1542 = vmxor %vm1495, %vm1522
      %vm1543 = vmxor %vm1496, %vm1521
      %vm1544 = vmxor %vm1496, %vm1522
      %vm1545 = vmxor %vm1497, %vm1521
      %vm1546 = vmxor %vm1497, %vm1522
      %vm1547 = vmxor %vm1498, %vm1521
      %vm1548 = vmxor %vm1498, %vm1522
      %vm1549 = vmxor %vm1499, %vm1521
      %vm1550 = vmxor %vm1499, %vm1522
      %vm1551 = vmxor %vm1500, %vm1521
      %vm1552 = vmxor %vm1500, %vm1522
      %vm1553 = vmxor %vm1501, %vm1521
      %vm1554 = vmxor %vm1501, %vm1522
      %vm1555 = vmxor %vm1502, %vm1521
      %vm1556 = vmxor %vm1502, %vm1522
      %vm1557 = vmxor %vm1503, %vm1521
      %vm1558 = vmxor %vm1503, %vm1522
      %vm1559 = vmxor %vm1504, %vm1521
      %vm1560 = vmxor %vm1504, %vm1522
      %vm1561 = vmxor %vm1505, %vm1521
      %vm1562 = vmxor %vm1505, %vm1522
      %vm1563 = vmxor %vm1506, %vm1521
      %vm1564 = vmxor %vm1506, %vm1522
      %vm1565 = vmxor %vm1507, %vm1521
      %vm1566 = vmxor %vm1507, %vm1522
      %vm1567 = vmxor %vm1508, %vm1521
      %vm1568 = vmxor %vm1508, %vm1522
      %vm1569 = vmxor %vm1509, %vm1521
      %vm1570 = vmxor %vm1509, %vm1522
      %vm1571 = vmxor %vm1510, %vm1521
      %vm1572 = vmxor %vm1510, %vm1522
      %vm1573 = vmxor %vm1511, %vm1521
      %vm1574 = vmxor %vm1511, %vm1522
      %vm1575 = vmxor %vm1512, %vm1521
      %vm1576 = vmxor %vm1512, %vm1522
      %vm1577 = vmxor %vm1513, %vm1521
      %vm1578 = vmxor %vm1513, %vm1522
      %vm1579 = vmxor %vm1514, %vm1521
      %vm1580 = vmxor %vm1514, %vm1522
      %vm1581 = vmxor %vm1515, %vm1521
      %vm1582 = vmxor %vm1515, %vm1522
      %vm1583 = vmxor %vm1516, %vm1521
      %vm1584 = vmxor %vm1516, %vm1522
      %vm1585 = vmxor %vm1517, %vm1521
      %vm1586 = vmxor %vm1517, %vm1522
      %v1587 = vsel %vm670, 1, 0
      %v1588 = vsel %vm671, 1, 0
      %v1589 = vsel %vm672, 1, 0
      %v1590 = vsel %vm673, 1, 0
      %v1591 = vsel %vm674, 1, 0
      %v1592 = vsel %vm675, 1, 0
      %v1593 = vsel %vm676, 1, 0
      %v1594 = vsel %vm677, 1, 0
      %v1595 = vsel %vm678, 1, 0
      %v1596 = vsel %vm679, 1, 0
      %v1597 = vsel %vm680, 1, 0
      %v1598 = vsel %vm681, 1, 0
      %v1599 = vsel %vm682, 1, 0
      %v1600 = vsel %vm683, 1, 0
      %v1601 = vsel %vm684, 1, 0
      %v1602 = vsel %vm685, 1, 0
      %v1603 = vsel %vm686, 1, 0
      %v1604 = vsel %vm687, 1, 0
      %v1605 = vsel %vm688, 1, 0
      %v1606 = vsel %vm689, 1, 0
      %v1607 = vsel %vm690, 1, 0
      %v1608 = vsel %vm691, 1, 0
      %v1609 = vsel %vm692, 1, 0
      %v1610 = vsel %vm693, 1, 0
      %v1611 = vsel %vm694, 1, 0
      %v1612 = vsel %vm695, 1, 0
      %v1613 = vsel %vm696, 1, 0
      %v1614 = vsel %vm697, 1, 0
      %v1615 = vsel %vm698, 1, 0
      %v1616 = vsel %vm699, 1, 0
      %v1617 = vsel %vm700, 1, 0
      %v1618 = vsel %vm701, 1, 0
      %1619 = vset.pattern.permute.xlu0 0
      %1620 = vperm.xlu0 %1619, %v1587
      %v1621 = vpop.permute.xlu0 %1620
      %1622 = vset.pattern.permute.xlu0 0
      %1623 = vperm.xlu0 %1622, %v1588
      %v1624 = vpop.permute.xlu0 %1623
      %1625 = vset.pattern.permute.xlu0 0
      %1626 = vperm.xlu0 %1625, %v1589
      %v1627 = vpop.permute.xlu0 %1626
      %1628 = vset.pattern.permute.xlu0 0
      %1629 = vperm.xlu0 %1628, %v1590
      %v1630 = vpop.permute.xlu0 %1629
      %1631 = vset.pattern.permute.xlu0 0
      %1632 = vperm.xlu0 %1631, %v1591
      %v1633 = vpop.permute.xlu0 %1632
      %1634 = vset.pattern.permute.xlu0 0
      %1635 = vperm.xlu0 %1634, %v1592
      %v1636 = vpop.permute.xlu0 %1635
      %1637 = vset.pattern.permute.xlu0 0
      %1638 = vperm.xlu0 %1637, %v1593
      %v1639 = vpop.permute.xlu0 %1638
      %1640 = vset.pattern.permute.xlu0 0
      %1641 = vperm.xlu0 %1640, %v1594
      %v1642 = vpop.permute.xlu0 %1641
      %1643 = vset.pattern.permute.xlu0 0
      %1644 = vperm.xlu0 %1643, %v1595
      %v1645 = vpop.permute.xlu0 %1644
      %1646 = vset.pattern.permute.xlu0 0
      %1647 = vperm.xlu0 %1646, %v1596
      %v1648 = vpop.permute.xlu0 %1647
      %1649 = vset.pattern.permute.xlu0 0
      %1650 = vperm.xlu0 %1649, %v1597
      %v1651 = vpop.permute.xlu0 %1650
      %1652 = vset.pattern.permute.xlu0 0
      %1653 = vperm.xlu0 %1652, %v1598
      %v1654 = vpop.permute.xlu0 %1653
      %1655 = vset.pattern.permute.xlu0 0
      %1656 = vperm.xlu0 %1655, %v1599
      %v1657 = vpop.permute.xlu0 %1656
      %1658 = vset.pattern.permute.xlu0 0
      %1659 = vperm.xlu0 %1658, %v1600
      %v1660 = vpop.permute.xlu0 %1659
      %1661 = vset.pattern.permute.xlu0 0
      %1662 = vperm.xlu0 %1661, %v1601
      %v1663 = vpop.permute.xlu0 %1662
      %1664 = vset.pattern.permute.xlu0 0
      %1665 = vperm.xlu0 %1664, %v1602
      %v1666 = vpop.permute.xlu0 %1665
      %1667 = vset.pattern.permute.xlu0 0
      %1668 = vperm.xlu0 %1667, %v1603
      %v1669 = vpop.permute.xlu0 %1668
      %1670 = vset.pattern.permute.xlu0 0
      %1671 = vperm.xlu0 %1670, %v1604
      %v1672 = vpop.permute.xlu0 %1671
      %1673 = vset.pattern.permute.xlu0 0
      %1674 = vperm.xlu0 %1673, %v1605
      %v1675 = vpop.permute.xlu0 %1674
      %1676 = vset.pattern.permute.xlu0 0
      %1677 = vperm.xlu0 %1676, %v1606
      %v1678 = vpop.permute.xlu0 %1677
      %1679 = vset.pattern.permute.xlu0 0
      %1680 = vperm.xlu0 %1679, %v1607
      %v1681 = vpop.permute.xlu0 %1680
      %1682 = vset.pattern.permute.xlu0 0
      %1683 = vperm.xlu0 %1682, %v1608
      %v1684 = vpop.permute.xlu0 %1683
      %1685 = vset.pattern.permute.xlu0 0
      %1686 = vperm.xlu0 %1685, %v1609
      %v1687 = vpop.permute.xlu0 %1686
      %1688 = vset.pattern.permute.xlu0 0
      %1689 = vperm.xlu0 %1688, %v1610
      %v1690 = vpop.permute.xlu0 %1689
      %1691 = vset.pattern.permute.xlu0 0
      %1692 = vperm.xlu0 %1691, %v1611
      %v1693 = vpop.permute.xlu0 %1692
      %1694 = vset.pattern.permute.xlu0 0
      %1695 = vperm.xlu0 %1694, %v1612
      %v1696 = vpop.permute.xlu0 %1695
      %1697 = vset.pattern.permute.xlu0 0
      %1698 = vperm.xlu0 %1697, %v1613
      %v1699 = vpop.permute.xlu0 %1698
      %1700 = vset.pattern.permute.xlu0 0
      %1701 = vperm.xlu0 %1700, %v1614
      %v1702 = vpop.permute.xlu0 %1701
      %1703 = vset.pattern.permute.xlu0 0
      %1704 = vperm.xlu0 %1703, %v1615
      %v1705 = vpop.permute.xlu0 %1704
      %1706 = vset.pattern.permute.xlu0 0
      %1707 = vperm.xlu0 %1706, %v1616
      %v1708 = vpop.permute.xlu0 %1707
      %1709 = vset.pattern.permute.xlu0 0
      %1710 = vperm.xlu0 %1709, %v1617
      %v1711 = vpop.permute.xlu0 %1710
      %1712 = vset.pattern.permute.xlu0 0
      %1713 = vperm.xlu0 %1712, %v1618
      %v1714 = vpop.permute.xlu0 %1713
      %vm1715 = vcmp.eq.s32.totalorder %v1621, 1
      %vm1716 = vcmp.eq.s32.totalorder %v1624, 1
      %vm1717 = vcmp.eq.s32.totalorder %v1627, 1
      %vm1718 = vcmp.eq.s32.totalorder %v1630, 1
      %vm1719 = vcmp.eq.s32.totalorder %v1633, 1
      %vm1720 = vcmp.eq.s32.totalorder %v1636, 1
      %vm1721 = vcmp.eq.s32.totalorder %v1639, 1
      %vm1722 = vcmp.eq.s32.totalorder %v1642, 1
      %vm1723 = vcmp.eq.s32.totalorder %v1645, 1
      %vm1724 = vcmp.eq.s32.totalorder %v1648, 1
      %vm1725 = vcmp.eq.s32.totalorder %v1651, 1
      %vm1726 = vcmp.eq.s32.totalorder %v1654, 1
      %vm1727 = vcmp.eq.s32.totalorder %v1657, 1
      %vm1728 = vcmp.eq.s32.totalorder %v1660, 1
      %vm1729 = vcmp.eq.s32.totalorder %v1663, 1
      %vm1730 = vcmp.eq.s32.totalorder %v1666, 1
      %vm1731 = vcmp.eq.s32.totalorder %v1669, 1
      %vm1732 = vcmp.eq.s32.totalorder %v1672, 1
      %vm1733 = vcmp.eq.s32.totalorder %v1675, 1
      %vm1734 = vcmp.eq.s32.totalorder %v1678, 1
      %vm1735 = vcmp.eq.s32.totalorder %v1681, 1
      %vm1736 = vcmp.eq.s32.totalorder %v1684, 1
      %vm1737 = vcmp.eq.s32.totalorder %v1687, 1
      %vm1738 = vcmp.eq.s32.totalorder %v1690, 1
      %vm1739 = vcmp.eq.s32.totalorder %v1693, 1
      %vm1740 = vcmp.eq.s32.totalorder %v1696, 1
      %vm1741 = vcmp.eq.s32.totalorder %v1699, 1
      %vm1742 = vcmp.eq.s32.totalorder %v1702, 1
      %vm1743 = vcmp.eq.s32.totalorder %v1705, 1
      %vm1744 = vcmp.eq.s32.totalorder %v1708, 1
      %vm1745 = vcmp.eq.s32.totalorder %v1711, 1
      %vm1746 = vcmp.eq.s32.totalorder %v1714, 1
      %v1747 = vsel %vm1357, 1, 0
      %v1748 = vperm.slane %v1747, 0
      %v1749 = vperm.slane %v1747, 1
      %vm1750 = vcmp.eq.s32.totalorder %v1748, 1
      %vm1751 = vcmp.eq.s32.totalorder %v1749, 1
      %vm1752 = vmxor %vm1715, %vm1750
      %vm1753 = vmxor %vm1715, %vm1751
      %vm1754 = vmxor %vm1716, %vm1750
      %vm1755 = vmxor %vm1716, %vm1751
      %vm1756 = vmxor %vm1717, %vm1750
      %vm1757 = vmxor %vm1717, %vm1751
      %vm1758 = vmxor %vm1718, %vm1750
      %vm1759 = vmxor %vm1718, %vm1751
      %vm1760 = vmxor %vm1719, %vm1750
      %vm1761 = vmxor %vm1719, %vm1751
      %vm1762 = vmxor %vm1720, %vm1750
      %vm1763 = vmxor %vm1720, %vm1751
      %vm1764 = vmxor %vm1721, %vm1750
      %vm1765 = vmxor %vm1721, %vm1751
      %vm1766 = vmxor %vm1722, %vm1750
      %vm1767 = vmxor %vm1722, %vm1751
      %vm1768 = vmxor %vm1723, %vm1750
      %vm1769 = vmxor %vm1723, %vm1751
      %vm1770 = vmxor %vm1724, %vm1750
      %vm1771 = vmxor %vm1724, %vm1751
      %vm1772 = vmxor %vm1725, %vm1750
      %vm1773 = vmxor %vm1725, %vm1751
      %vm1774 = vmxor %vm1726, %vm1750
      %vm1775 = vmxor %vm1726, %vm1751
      %vm1776 = vmxor %vm1727, %vm1750
      %vm1777 = vmxor %vm1727, %vm1751
      %vm1778 = vmxor %vm1728, %vm1750
      %vm1779 = vmxor %vm1728, %vm1751
      %vm1780 = vmxor %vm1729, %vm1750
      %vm1781 = vmxor %vm1729, %vm1751
      %vm1782 = vmxor %vm1730, %vm1750
      %vm1783 = vmxor %vm1730, %vm1751
      %vm1784 = vmxor %vm1731, %vm1750
      %vm1785 = vmxor %vm1731, %vm1751
      %vm1786 = vmxor %vm1732, %vm1750
      %vm1787 = vmxor %vm1732, %vm1751
      %vm1788 = vmxor %vm1733, %vm1750
      %vm1789 = vmxor %vm1733, %vm1751
      %vm1790 = vmxor %vm1734, %vm1750
      %vm1791 = vmxor %vm1734, %vm1751
      %vm1792 = vmxor %vm1735, %vm1750
      %vm1793 = vmxor %vm1735, %vm1751
      %vm1794 = vmxor %vm1736, %vm1750
      %vm1795 = vmxor %vm1736, %vm1751
      %vm1796 = vmxor %vm1737, %vm1750
      %vm1797 = vmxor %vm1737, %vm1751
      %vm1798 = vmxor %vm1738, %vm1750
      %vm1799 = vmxor %vm1738, %vm1751
      %vm1800 = vmxor %vm1739, %vm1750
      %vm1801 = vmxor %vm1739, %vm1751
      %vm1802 = vmxor %vm1740, %vm1750
      %vm1803 = vmxor %vm1740, %vm1751
      %vm1804 = vmxor %vm1741, %vm1750
      %vm1805 = vmxor %vm1741, %vm1751
      %vm1806 = vmxor %vm1742, %vm1750
      %vm1807 = vmxor %vm1742, %vm1751
      %vm1808 = vmxor %vm1743, %vm1750
      %vm1809 = vmxor %vm1743, %vm1751
      %vm1810 = vmxor %vm1744, %vm1750
      %vm1811 = vmxor %vm1744, %vm1751
      %vm1812 = vmxor %vm1745, %vm1750
      %vm1813 = vmxor %vm1745, %vm1751
      %vm1814 = vmxor %vm1746, %vm1750
      %vm1815 = vmxor %vm1746, %vm1751
      %v1816 = vsel %vm1523, %v1290, 1e+20
      %v1817 = vsel %vm1524, %v1291, 1e+20
      %v1818 = vsel %vm1525, %v1292, 1e+20
      %v1819 = vsel %vm1526, %v1293, 1e+20
      %v1820 = vsel %vm1527, %v1294, 1e+20
      %v1821 = vsel %vm1528, %v1295, 1e+20
      %v1822 = vsel %vm1529, %v1296, 1e+20
      %v1823 = vsel %vm1530, %v1297, 1e+20
      %v1824 = vsel %vm1531, %v1298, 1e+20
      %v1825 = vsel %vm1532, %v1299, 1e+20
      %v1826 = vsel %vm1533, %v1300, 1e+20
      %v1827 = vsel %vm1534, %v1301, 1e+20
      %v1828 = vsel %vm1535, %v1302, 1e+20
      %v1829 = vsel %vm1536, %v1303, 1e+20
      %v1830 = vsel %vm1537, %v1304, 1e+20
      %v1831 = vsel %vm1538, %v1305, 1e+20
      %v1832 = vsel %vm1539, %v1306, 1e+20
      %v1833 = vsel %vm1540, %v1307, 1e+20
      %v1834 = vsel %vm1541, %v1308, 1e+20
      %v1835 = vsel %vm1542, %v1309, 1e+20
      %v1836 = vsel %vm1543, %v1310, 1e+20
      %v1837 = vsel %vm1544, %v1311, 1e+20
      %v1838 = vsel %vm1545, %v1312, 1e+20
      %v1839 = vsel %vm1546, %v1313, 1e+20
      %v1840 = vsel %vm1547, %v1314, 1e+20
      %v1841 = vsel %vm1548, %v1315, 1e+20
      %v1842 = vsel %vm1549, %v1316, 1e+20
      %v1843 = vsel %vm1550, %v1317, 1e+20
      %v1844 = vsel %vm1551, %v1318, 1e+20
      %v1845 = vsel %vm1552, %v1319, 1e+20
      %v1846 = vsel %vm1553, %v1320, 1e+20
      %v1847 = vsel %vm1554, %v1321, 1e+20
      %v1848 = vsel %vm1555, %v1322, 1e+20
      %v1849 = vsel %vm1556, %v1323, 1e+20
      %v1850 = vsel %vm1557, %v1324, 1e+20
      %v1851 = vsel %vm1558, %v1325, 1e+20
      %v1852 = vsel %vm1559, %v1326, 1e+20
      %v1853 = vsel %vm1560, %v1327, 1e+20
      %v1854 = vsel %vm1561, %v1328, 1e+20
      %v1855 = vsel %vm1562, %v1329, 1e+20
      %v1856 = vsel %vm1563, %v1330, 1e+20
      %v1857 = vsel %vm1564, %v1331, 1e+20
      %v1858 = vsel %vm1565, %v1332, 1e+20
      %v1859 = vsel %vm1566, %v1333, 1e+20
      %v1860 = vsel %vm1567, %v1334, 1e+20
      %v1861 = vsel %vm1568, %v1335, 1e+20
      %v1862 = vsel %vm1569, %v1336, 1e+20
      %v1863 = vsel %vm1570, %v1337, 1e+20
      %v1864 = vsel %vm1571, %v1338, 1e+20
      %v1865 = vsel %vm1572, %v1339, 1e+20
      %v1866 = vsel %vm1573, %v1340, 1e+20
      %v1867 = vsel %vm1574, %v1341, 1e+20
      %v1868 = vsel %vm1575, %v1342, 1e+20
      %v1869 = vsel %vm1576, %v1343, 1e+20
      %v1870 = vsel %vm1577, %v1344, 1e+20
      %v1871 = vsel %vm1578, %v1345, 1e+20
      %v1872 = vsel %vm1579, %v1346, 1e+20
      %v1873 = vsel %vm1580, %v1347, 1e+20
      %v1874 = vsel %vm1581, %v1348, 1e+20
      %v1875 = vsel %vm1582, %v1349, 1e+20
      %v1876 = vsel %vm1583, %v1350, 1e+20
      %v1877 = vsel %vm1584, %v1351, 1e+20
      %v1878 = vsel %vm1585, %v1352, 1e+20
      %v1879 = vsel %vm1586, %v1353, 1e+20
      %v1880 = vsel %vm1752, %v1290, 1e+20
      %v1881 = vsel %vm1753, %v1291, 1e+20
      %v1882 = vsel %vm1754, %v1292, 1e+20
      %v1883 = vsel %vm1755, %v1293, 1e+20
      %v1884 = vsel %vm1756, %v1294, 1e+20
      %v1885 = vsel %vm1757, %v1295, 1e+20
      %v1886 = vsel %vm1758, %v1296, 1e+20
      %v1887 = vsel %vm1759, %v1297, 1e+20
      %v1888 = vsel %vm1760, %v1298, 1e+20
      %v1889 = vsel %vm1761, %v1299, 1e+20
      %v1890 = vsel %vm1762, %v1300, 1e+20
      %v1891 = vsel %vm1763, %v1301, 1e+20
      %v1892 = vsel %vm1764, %v1302, 1e+20
      %v1893 = vsel %vm1765, %v1303, 1e+20
      %v1894 = vsel %vm1766, %v1304, 1e+20
      %v1895 = vsel %vm1767, %v1305, 1e+20
      %v1896 = vsel %vm1768, %v1306, 1e+20
      %v1897 = vsel %vm1769, %v1307, 1e+20
      %v1898 = vsel %vm1770, %v1308, 1e+20
      %v1899 = vsel %vm1771, %v1309, 1e+20
      %v1900 = vsel %vm1772, %v1310, 1e+20
      %v1901 = vsel %vm1773, %v1311, 1e+20
      %v1902 = vsel %vm1774, %v1312, 1e+20
      %v1903 = vsel %vm1775, %v1313, 1e+20
      %v1904 = vsel %vm1776, %v1314, 1e+20
      %v1905 = vsel %vm1777, %v1315, 1e+20
      %v1906 = vsel %vm1778, %v1316, 1e+20
      %v1907 = vsel %vm1779, %v1317, 1e+20
      %v1908 = vsel %vm1780, %v1318, 1e+20
      %v1909 = vsel %vm1781, %v1319, 1e+20
      %v1910 = vsel %vm1782, %v1320, 1e+20
      %v1911 = vsel %vm1783, %v1321, 1e+20
      %v1912 = vsel %vm1784, %v1322, 1e+20
      %v1913 = vsel %vm1785, %v1323, 1e+20
      %v1914 = vsel %vm1786, %v1324, 1e+20
      %v1915 = vsel %vm1787, %v1325, 1e+20
      %v1916 = vsel %vm1788, %v1326, 1e+20
      %v1917 = vsel %vm1789, %v1327, 1e+20
      %v1918 = vsel %vm1790, %v1328, 1e+20
      %v1919 = vsel %vm1791, %v1329, 1e+20
      %v1920 = vsel %vm1792, %v1330, 1e+20
      %v1921 = vsel %vm1793, %v1331, 1e+20
      %v1922 = vsel %vm1794, %v1332, 1e+20
      %v1923 = vsel %vm1795, %v1333, 1e+20
      %v1924 = vsel %vm1796, %v1334, 1e+20
      %v1925 = vsel %vm1797, %v1335, 1e+20
      %v1926 = vsel %vm1798, %v1336, 1e+20
      %v1927 = vsel %vm1799, %v1337, 1e+20
      %v1928 = vsel %vm1800, %v1338, 1e+20
      %v1929 = vsel %vm1801, %v1339, 1e+20
      %v1930 = vsel %vm1802, %v1340, 1e+20
      %v1931 = vsel %vm1803, %v1341, 1e+20
      %v1932 = vsel %vm1804, %v1342, 1e+20
      %v1933 = vsel %vm1805, %v1343, 1e+20
      %v1934 = vsel %vm1806, %v1344, 1e+20
      %v1935 = vsel %vm1807, %v1345, 1e+20
      %v1936 = vsel %vm1808, %v1346, 1e+20
      %v1937 = vsel %vm1809, %v1347, 1e+20
      %v1938 = vsel %vm1810, %v1348, 1e+20
      %v1939 = vsel %vm1811, %v1349, 1e+20
      %v1940 = vsel %vm1812, %v1350, 1e+20
      %v1941 = vsel %vm1813, %v1351, 1e+20
      %v1942 = vsel %vm1814, %v1352, 1e+20
      %v1943 = vsel %vm1815, %v1353, 1e+20
      %v1944 = vmin.f32 %v1816, %v1820
      %v1945 = vmin.f32 %v1818, %v1822
      %v1946 = vmin.f32 %v1944, %v1824
      %v1947 = vmin.f32 %v1945, %v1826
      %v1948 = vmin.f32 %v1946, %v1828
      %v1949 = vmin.f32 %v1947, %v1830
      %v1950 = vmin.f32 %v1948, %v1832
      %v1951 = vmin.f32 %v1949, %v1834
      %v1952 = vmin.f32 %v1950, %v1836
      %v1953 = vmin.f32 %v1951, %v1838
      %v1954 = vmin.f32 %v1952, %v1840
      %v1955 = vmin.f32 %v1953, %v1842
      %v1956 = vmin.f32 %v1954, %v1844
      %v1957 = vmin.f32 %v1955, %v1846
      %v1958 = vmin.f32 %v1956, %v1848
      %v1959 = vmin.f32 %v1957, %v1850
      %v1960 = vmin.f32 %v1958, %v1852
      %v1961 = vmin.f32 %v1959, %v1854
      %v1962 = vmin.f32 %v1960, %v1856
      %v1963 = vmin.f32 %v1961, %v1858
      %v1964 = vmin.f32 %v1962, %v1860
      %v1965 = vmin.f32 %v1963, %v1862
      %v1966 = vmin.f32 %v1964, %v1864
      %v1967 = vmin.f32 %v1965, %v1866
      %v1968 = vmin.f32 %v1966, %v1868
      %v1969 = vmin.f32 %v1967, %v1870
      %v1970 = vmin.f32 %v1968, %v1872
      %v1971 = vmin.f32 %v1969, %v1874
      %v1972 = vmin.f32 %v1970, %v1876
      %v1973 = vmin.f32 %v1971, %v1878
      %v1974 = vmin.f32 %v1972, %v1973
      %v1975 = vmin.f32 %v1817, %v1821
      %v1976 = vmin.f32 %v1819, %v1823
      %v1977 = vmin.f32 %v1975, %v1825
      %v1978 = vmin.f32 %v1976, %v1827
      %v1979 = vmin.f32 %v1977, %v1829
      %v1980 = vmin.f32 %v1978, %v1831
      %v1981 = vmin.f32 %v1979, %v1833
      %v1982 = vmin.f32 %v1980, %v1835
      %v1983 = vmin.f32 %v1981, %v1837
      %v1984 = vmin.f32 %v1982, %v1839
      %v1985 = vmin.f32 %v1983, %v1841
      %v1986 = vmin.f32 %v1984, %v1843
      %v1987 = vmin.f32 %v1985, %v1845
      %v1988 = vmin.f32 %v1986, %v1847
      %v1989 = vmin.f32 %v1987, %v1849
      %v1990 = vmin.f32 %v1988, %v1851
      %v1991 = vmin.f32 %v1989, %v1853
      %v1992 = vmin.f32 %v1990, %v1855
      %v1993 = vmin.f32 %v1991, %v1857
      %v1994 = vmin.f32 %v1992, %v1859
      %v1995 = vmin.f32 %v1993, %v1861
      %v1996 = vmin.f32 %v1994, %v1863
      %v1997 = vmin.f32 %v1995, %v1865
      %v1998 = vmin.f32 %v1996, %v1867
      %v1999 = vmin.f32 %v1997, %v1869
      %v2000 = vmin.f32 %v1998, %v1871
      %v2001 = vmin.f32 %v1999, %v1873
      %v2002 = vmin.f32 %v2000, %v1875
      %v2003 = vmin.f32 %v2001, %v1877
      %v2004 = vmin.f32 %v2002, %v1879
      %v2005 = vmin.f32 %v2003, %v2004
      %v2006 = vmin.f32 %v1880, %v1884
      %v2007 = vmin.f32 %v1882, %v1886
      %v2008 = vmin.f32 %v2006, %v1888
      %v2009 = vmin.f32 %v2007, %v1890
      %v2010 = vmin.f32 %v2008, %v1892
      %v2011 = vmin.f32 %v2009, %v1894
      %v2012 = vmin.f32 %v2010, %v1896
      %v2013 = vmin.f32 %v2011, %v1898
      %v2014 = vmin.f32 %v2012, %v1900
      %v2015 = vmin.f32 %v2013, %v1902
      %v2016 = vmin.f32 %v2014, %v1904
      %v2017 = vmin.f32 %v2015, %v1906
      %v2018 = vmin.f32 %v2016, %v1908
      %v2019 = vmin.f32 %v2017, %v1910
      %v2020 = vmin.f32 %v2018, %v1912
      %v2021 = vmin.f32 %v2019, %v1914
      %v2022 = vmin.f32 %v2020, %v1916
      %v2023 = vmin.f32 %v2021, %v1918
      %v2024 = vmin.f32 %v2022, %v1920
      %v2025 = vmin.f32 %v2023, %v1922
      %v2026 = vmin.f32 %v2024, %v1924
      %v2027 = vmin.f32 %v2025, %v1926
      %v2028 = vmin.f32 %v2026, %v1928
      %v2029 = vmin.f32 %v2027, %v1930
      %v2030 = vmin.f32 %v2028, %v1932
      %v2031 = vmin.f32 %v2029, %v1934
      %v2032 = vmin.f32 %v2030, %v1936
      %v2033 = vmin.f32 %v2031, %v1938
      %v2034 = vmin.f32 %v2032, %v1940
      %v2035 = vmin.f32 %v2033, %v1942
      %v2036 = vmin.f32 %v2034, %v2035
      %v2037 = vmin.f32 %v1881, %v1885
      %v2038 = vmin.f32 %v1883, %v1887
      %v2039 = vmin.f32 %v2037, %v1889
      %v2040 = vmin.f32 %v2038, %v1891
      %v2041 = vmin.f32 %v2039, %v1893
      %v2042 = vmin.f32 %v2040, %v1895
      %v2043 = vmin.f32 %v2041, %v1897
      %v2044 = vmin.f32 %v2042, %v1899
      %v2045 = vmin.f32 %v2043, %v1901
      %v2046 = vmin.f32 %v2044, %v1903
      %v2047 = vmin.f32 %v2045, %v1905
      %v2048 = vmin.f32 %v2046, %v1907
      %v2049 = vmin.f32 %v2047, %v1909
      %v2050 = vmin.f32 %v2048, %v1911
      %v2051 = vmin.f32 %v2049, %v1913
      %v2052 = vmin.f32 %v2050, %v1915
      %v2053 = vmin.f32 %v2051, %v1917
      %v2054 = vmin.f32 %v2052, %v1919
      %v2055 = vmin.f32 %v2053, %v1921
      %v2056 = vmin.f32 %v2054, %v1923
      %v2057 = vmin.f32 %v2055, %v1925
      %v2058 = vmin.f32 %v2056, %v1927
      %v2059 = vmin.f32 %v2057, %v1929
      %v2060 = vmin.f32 %v2058, %v1931
      %v2061 = vmin.f32 %v2059, %v1933
      %v2062 = vmin.f32 %v2060, %v1935
      %v2063 = vmin.f32 %v2061, %v1937
      %v2064 = vmin.f32 %v2062, %v1939
      %v2065 = vmin.f32 %v2063, %v1941
      %v2066 = vmin.f32 %v2064, %v1943
      %v2067 = vmin.f32 %v2065, %v2066
      %v2068 = vld [vmem:[#allocation2] sm:$0xff]
      %v2069 = vld [vmem:[#allocation2 + $0x8] sm:$0xff]
      %v2070 = vmin.f32 %v2068, %v1974
      %v2071 = vmin.f32 %v2069, %v2005
      %2072 = vst [vmem:[#allocation2] sm:$0xff] %v2070
      %2073 = vst [vmem:[#allocation2 + $0x8] sm:$0xff] %v2071
      %v2074 = vld [vmem:[#allocation3] sm:$0xff]
      %v2075 = vld [vmem:[#allocation3 + $0x8] sm:$0xff]
      %v2076 = vmin.f32 %v2074, %v2036
      %v2077 = vmin.f32 %v2075, %v2067
      %2078 = vst [vmem:[#allocation3] sm:$0xff] %v2076
      %2079 = vst [vmem:[#allocation3 + $0x8] sm:$0xff] %v2077
      // Predicated region
      $region57: #{hausdorff_dt_loss.1} parent=51 // pred_check
        %p2080 = pneg %p497
      $region58: #{hausdorff_dt_loss.1} parent=51 // pred_check_branch
        %2082 = sbr.rel (%p2080) target = $region60
      $region59: #{hausdorff_dt_loss.1} parent=51 // pred_region
        %v2083 = vld [vmem:[#allocation2] sm:$0xff]
        %v2084 = vld [vmem:[#allocation2 + $0x8] sm:$0xff]
        %v2085 = vrot.slane %v2083, 4
        %v2086 = vmin.f32 %v2083, %v2085
        %v2087 = vrot.slane %v2086, 2
        %v2088 = vmin.f32 %v2086, %v2087
        %v2089 = vrot.slane %v2088, 1
        %v2090 = vmin.f32 %v2088, %v2089
        %v2091 = vrot.slane %v2084, 4
        %v2092 = vmin.f32 %v2084, %v2091
        %v2093 = vrot.slane %v2092, 2
        %v2094 = vmin.f32 %v2092, %v2093
        %v2095 = vrot.slane %v2094, 1
        %v2096 = vmin.f32 %v2094, %v2095
        %v2097 = vld [vmem:[#allocation3] sm:$0xff]
        %v2098 = vld [vmem:[#allocation3 + $0x8] sm:$0xff]
        %v2099 = vrot.slane %v2097, 4
        %v2100 = vmin.f32 %v2097, %v2099
        %v2101 = vrot.slane %v2100, 2
        %v2102 = vmin.f32 %v2100, %v2101
        %v2103 = vrot.slane %v2102, 1
        %v2104 = vmin.f32 %v2102, %v2103
        %v2105 = vrot.slane %v2098, 4
        %v2106 = vmin.f32 %v2098, %v2105
        %v2107 = vrot.slane %v2106, 2
        %v2108 = vmin.f32 %v2106, %v2107
        %v2109 = vrot.slane %v2108, 1
        %v2110 = vmin.f32 %v2108, %v2109
        %v2111 = vrsqrt.pop %v2090
        %v2112 = vmul.f32 %v2111, %v2090
        %v2113 = vmul.f32 %v2112, %v2111
        %v2114 = vmul.f32 0.5, %v2113
        %v2115 = vsub.f32 1.5, %v2114
        %v2116 = vmul.f32 %v2111, %v2115
        %v2117 = vmul.f32 %v2090, %v2116
        %vm2118 = vcmp.eq.f32.partialorder %v2090, inf
        %v2119 = vsel %vm2118, %v2090, %v2117
        %vm2120 = vcmp.eq.f32.partialorder %v2090, 0.0
        %v2121 = vand.u32 %v2090, 2147483648
        %v2122 = vsel %vm2120, %v2121, %v2119
        %v2123 = vrsqrt.pop %v2096
        %v2124 = vmul.f32 %v2123, %v2096
        %v2125 = vmul.f32 %v2124, %v2123
        %v2126 = vmul.f32 0.5, %v2125
        %v2127 = vsub.f32 1.5, %v2126
        %v2128 = vmul.f32 %v2123, %v2127
        %v2129 = vmul.f32 %v2096, %v2128
        %vm2130 = vcmp.eq.f32.partialorder %v2096, inf
        %v2131 = vsel %vm2130, %v2096, %v2129
        %vm2132 = vcmp.eq.f32.partialorder %v2096, 0.0
        %v2133 = vand.u32 %v2096, 2147483648
        %v2134 = vsel %vm2132, %v2133, %v2131
        %v2135 = vrsqrt.pop %v2104
        %v2136 = vmul.f32 %v2135, %v2104
        %v2137 = vmul.f32 %v2136, %v2135
        %v2138 = vmul.f32 0.5, %v2137
        %v2139 = vsub.f32 1.5, %v2138
        %v2140 = vmul.f32 %v2135, %v2139
        %v2141 = vmul.f32 %v2104, %v2140
        %vm2142 = vcmp.eq.f32.partialorder %v2104, inf
        %v2143 = vsel %vm2142, %v2104, %v2141
        %vm2144 = vcmp.eq.f32.partialorder %v2104, 0.0
        %v2145 = vand.u32 %v2104, 2147483648
        %v2146 = vsel %vm2144, %v2145, %v2143
        %v2147 = vrsqrt.pop %v2110
        %v2148 = vmul.f32 %v2147, %v2110
        %v2149 = vmul.f32 %v2148, %v2147
        %v2150 = vmul.f32 0.5, %v2149
        %v2151 = vsub.f32 1.5, %v2150
        %v2152 = vmul.f32 %v2147, %v2151
        %v2153 = vmul.f32 %v2110, %v2152
        %vm2154 = vcmp.eq.f32.partialorder %v2110, inf
        %v2155 = vsel %vm2154, %v2110, %v2153
        %vm2156 = vcmp.eq.f32.partialorder %v2110, 0.0
        %v2157 = vand.u32 %v2110, 2147483648
        %v2158 = vsel %vm2156, %v2157, %v2155
        %v2159 = vld [vmem:[%s454] sm:$0x3]
        %v2160 = vxor.u32 %v2159, 2147483648
        %v2161 = vmul.f32 %v2160, 1.442695
        %v2162 = vpow.pop %v2161
        %v2163 = vadd.f32 %v2162, 1.0
        %v2164 = vrcp.pop %v2163
        %v2165 = vmul.f32 %v2163, %v2164
        %v2166 = vsub.f32 1.0, %v2165
        %v2167 = vmul.f32 %v2164, %v2166
        %v2168 = vadd.f32 %v2164, %v2167
        %vm2169 = vweird.f32 %v2163
        %vm2170 = vweird.f32 %v2164
        %vm2171 = vmor %vm2169, %vm2170
        %v2172 = vsel %vm2171, %v2164, %v2168
        %v2173 = vand.u32 2147483647, %v2163
        %vm2174 = vcmp.eq.f32.partialorder %v2173, 8.507059e+37
        %v2175 = vand.u32 %v2163, 2147483648
        %v2176 = vor.u32 1.1754944e-38, %v2175
        %v2177 = vsel %vm2174, %v2176, %v2172
        %v2178 = vmul.f32 1.0, %v2177
        %v2179 = vld [vmem:[%s463] sm:$0x3]
        %v2180 = vsub.f32 %v2178, %v2179
        %v2181 = vmul.f32 %v2180, %v2180
        %v2182 = vmax.f32 %v2122, 1e-30
        %v2183 = vmax.f32 %v2134, 1e-30
        %v2184 = vlog2.pop %v2182
        %v2185 = vmul.f32 %v2184, 0.6931472
        %v2186 = vlog2.pop %v2183
        %v2187 = vmul.f32 %v2186, 0.6931472
        %v2188 = vmul.f32 %v2185, 0.2
        %v2189 = vmul.f32 %v2187, 0.2
        %v2190 = vmul.f32 %v2188, 1.442695
        %v2191 = vpow.pop %v2190
        %v2192 = vmul.f32 %v2189, 1.442695
        %v2193 = vpow.pop %v2192
        %v2196 = vrot.slane %v2193, 7
        %vm2197 = vcmask 1040384
        %v2198 = vsel %vm2197, %v2191, %v2196
        %v2200 = vmul.f32 %v2181, %v2198
        %v2202 = vperm.slane %v2200, 0
        %v2203 = vperm.slane %v2200, 1
        %v2206 = vsel %vm2197, %v2202, 0.0
        %v2207 = vsel %vm2197, %v2203, 0.0
        %v2208 = vadd.f32 %v2206, %v2207
        %2209 = vadd.xlane.f32.xlu0 %v2208
        %v2210 = vpop.xlane.xlu0 %2209
        %v2211 = vrot.slane %v2210, 4
        %v2212 = vadd.f32 %v2210, %v2211
        %v2213 = vrot.slane %v2212, 2
        %v2214 = vadd.f32 %v2212, %v2213
        %v2215 = vrot.slane %v2214, 1
        %v2216 = vadd.f32 %v2214, %v2215
        %s2217 = vtos %v2216
        %v2218 = vstv %s2217
        %vm2219 = vcmask 0
        %2220 = vst.msk [vmem:[%s490] sm:$0x1] %vm2219, %v2218
        %v2221 = vmax.f32 %v2146, 1e-30
        %v2222 = vmax.f32 %v2158, 1e-30
        %v2223 = vlog2.pop %v2221
        %v2224 = vmul.f32 %v2223, 0.6931472
        %v2225 = vlog2.pop %v2222
        %v2226 = vmul.f32 %v2225, 0.6931472
        %v2227 = vmul.f32 %v2224, 0.2
        %v2228 = vmul.f32 %v2226, 0.2
        %v2229 = vmul.f32 %v2227, 1.442695
        %v2230 = vpow.pop %v2229
        %v2231 = vmul.f32 %v2228, 1.442695
        %v2232 = vpow.pop %v2231
        %v2235 = vrot.slane %v2232, 7
        %v2236 = vsel %vm2197, %v2230, %v2235
        %v2238 = vmul.f32 %v2181, %v2236
        %v2240 = vperm.slane %v2238, 0
        %v2241 = vperm.slane %v2238, 1
        %v2244 = vsel %vm2197, %v2240, 0.0
        %v2245 = vsel %vm2197, %v2241, 0.0
        %v2246 = vadd.f32 %v2244, %v2245
        %2247 = vadd.xlane.f32.xlu0 %v2246
        %v2248 = vpop.xlane.xlu0 %2247
        %v2249 = vrot.slane %v2248, 4
        %v2250 = vadd.f32 %v2248, %v2249
        %v2251 = vrot.slane %v2250, 2
        %v2252 = vadd.f32 %v2250, %v2251
        %v2253 = vrot.slane %v2252, 1
        %v2254 = vadd.f32 %v2252, %v2253
        %s2255 = vtos %v2254
        %v2256 = vstv %s2255
        %2257 = vst.msk [vmem:[%s496] sm:$0x1] %vm2219, %v2256
      $region60: #{hausdorff_dt_loss.1} parent=51 // pred_fallthru
        _
      %p2258 = scmp.lt.s32.totalorder %s26, 1
      %s2259 = scalar_select %p2258, %s26, 1
      %p2260 = scmp.lt.s32.totalorder %s27, 0
      %s2261 = scalar_select %p2260, %s27, 0
      %s2262 = sadd.s32 %s2261, %s2259
      %s2263 = scalar_lea.vmem %s8, %s2262
      %p2264 = scmp.lt.s32.totalorder %s26, 1
      %s2265 = scalar_select %p2264, %s26, 1
      %p2266 = scmp.lt.s32.totalorder %s27, 0
      %s2267 = scalar_select %p2266, %s27, 0
      %s2268 = sadd.s32 %s2267, %s2265
      %s2269 = scalar_lea.vmem %s9, %s2268
      // Predicated region
      $region61: #{hausdorff_dt_loss.1} parent=51 // pred_check
        %p2270 = pneg %p262
      $region62: #{hausdorff_dt_loss.1} parent=51 // pred_check_branch
        %2272 = sbr.rel (%p2270) target = $region64
      $region63: #{hausdorff_dt_loss.1} parent=51 // pred_region
        _
      $region64: #{hausdorff_dt_loss.1} parent=51 // pred_fallthru
        _
      // Predicated region
      $region65: #{hausdorff_dt_loss.1} parent=51 // pred_check
        %p2273 = pneg %p290
      $region66: #{hausdorff_dt_loss.1} parent=51 // pred_check_branch
        %2275 = sbr.rel (%p2273) target = $region68
      $region67: #{hausdorff_dt_loss.1} parent=51 // pred_region
        _
      $region68: #{hausdorff_dt_loss.1} parent=51 // pred_fallthru
        _
    $region52: #{hausdorff_dt_loss.1} parent=5 // pred_fallthru
      _
    %p2276 = scmp.le.s32.totalorder 2, %s16
    // Predicated region
    $region69: #{hausdorff_dt_loss.1} parent=5 // pred_check
      %p2277 = pneg %p2276
    $region70: #{hausdorff_dt_loss.1} parent=5 // pred_check_branch
      %2279 = sbr.rel (%p2277) target = $region72
    $region71: #{hausdorff_dt_loss.1} parent=5 // pred_region
      %s2280 = ssub.s32 %s16, 2
      // Predicated region
      $region73: #{hausdorff_dt_loss.1} parent=71 // pred_check
        %p2281 = pneg %p268
      $region74: #{hausdorff_dt_loss.1} parent=71 // pred_check_branch
        %2283 = sbr.rel (%p2281) target = $region76
      $region75: #{hausdorff_dt_loss.1} parent=71 // pred_region
        %p2284 = scmp.lt.s32.totalorder %s29, 1
        %s2285 = scalar_select %p2284, %s29, 1
        %p2286 = scmp.lt.s32.totalorder %s30, 0
        %s2287 = scalar_select %p2286, %s30, 0
        %s2288 = sadd.s32 %s2287, %s2285
        %s2289 = scalar_lea.vmem %s8, %s2288
      $region76: #{hausdorff_dt_loss.1} parent=71 // pred_fallthru
        _
      // Predicated region
      $region77: #{hausdorff_dt_loss.1} parent=71 // pred_check
        %p2290 = pneg %p296
      $region78: #{hausdorff_dt_loss.1} parent=71 // pred_check_branch
        %2292 = sbr.rel (%p2290) target = $region80
      $region79: #{hausdorff_dt_loss.1} parent=71 // pred_region
        %p2293 = scmp.lt.s32.totalorder %s29, 1
        %s2294 = scalar_select %p2293, %s29, 1
        %p2295 = scmp.lt.s32.totalorder %s30, 0
        %s2296 = scalar_select %p2295, %s30, 0
        %s2297 = sadd.s32 %s2296, %s2294
        %s2298 = scalar_lea.vmem %s9, %s2297
      $region80: #{hausdorff_dt_loss.1} parent=71 // pred_fallthru
        _
    $region72: #{hausdorff_dt_loss.1} parent=5 // pred_fallthru
      _
  $region6: #{hausdorff_dt_loss.1} parent=0 // loop_footer
    %s20 = sadd.s32 1, %s16
  $region7: #{hausdorff_dt_loss.1} parent=0 // loop_footer_branch
    %15 = sbr.rel target = $region3
  $region8: #{hausdorff_dt_loss.1} parent=0 // loop_exit
    _

</llo_original>
